<compile_context>
chip_gen: v7x
topology: tpu7x:2x2x1
jax: 0.10.0
libtpu: 0.0.40
codegen_flags: <defaults>
</compile_context>

<pallas_src>
import math

import jax
import jax.numpy as jnp
from jax import lax
from jax.experimental import pallas as pl
from jax.experimental.pallas import tpu as pltpu

BN_EPS = 1e-5                      # torch BatchNorm3d default
MATMUL_DTYPE = jnp.bfloat16        # matmul-input dtype (f32 MXU accumulation)
STORE_DTYPE = jnp.bfloat16         # dtype of the y1 / y2 intermediates in HBM
_VMEM_LIMIT = 32 * 1024 * 1024     # per-sample blocks are small; safe on v7x too


# ------------------------------- Pallas kernels -------------------------------

def _conv1_kernel(x_ref, w_ref, z_ref, s_ref, ss_ref):
    """Pass A: Conv3d(Cin->Cout,3,1,1) on one sample as a single matmul against
    the stacked folded weight, plus f32 BN partial sums over the valid columns.

    x_ref : (1, Cin*H*W, D+2)     bf16  D-padded input sample (pad cols are 0)
    w_ref : (3*Cout*H*W, Cin*H*W) bf16  folded conv weight (resident)
    z_ref : (1, Cout*H*W, D+2)    bf16  conv output (pad cols stored as 0)
    s_ref, ss_ref : (1, Cout*H*W, 1) f32 per-row sum / sum-of-squares partials
    """
    c2out = z_ref.shape[1]
    d = z_ref.shape[2] - 2
    a = jnp.dot(w_ref[...], x_ref[0], preferred_element_type=jnp.float32)
    # Combine the three D-taps: valid output column q (q in [1, D]) reads the
    # padded input columns q-1, q, q+1 -> static lane-offset slices.
    z = (a[0 * c2out:1 * c2out, 0:d]
         + a[1 * c2out:2 * c2out, 1:d + 1]
         + a[2 * c2out:3 * c2out, 2:d + 2])
    pad = jnp.zeros((c2out, 1), jnp.float32)
    z_ref[0] = jnp.concatenate([pad, z, pad], axis=1).astype(z_ref.dtype)
    s_ref[0] = jnp.sum(z, axis=1, keepdims=True)
    ss_ref[0] = jnp.sum(z * z, axis=1, keepdims=True)


def _bn1_silu_conv2_kernel(z1_ref, w_ref, sc_ref, sh_ref, z2_ref, s_ref, ss_ref):
    """Pass B: BN1 affine + SiLU applied to the y1 tile in registers (h1 never
    hits HBM), then Conv3d(Cout->Cout,3,1,1) exactly like pass A + BN2 partials."""
    c2out = z2_ref.shape[1]
    dp = z1_ref.shape[2]
    d = dp - 2
    h = z1_ref[0].astype(jnp.float32) * sc_ref[...] + sh_ref[...]
    h = h * jax.nn.sigmoid(h)                                   # SiLU
    # Re-zero the D pad columns: they are conv2's zero padding, and the affine
    # shift + SiLU would otherwise make them non-zero.
    col = lax.broadcasted_iota(jnp.int32, (1, dp), 1)
    h = jnp.where((col >= 1) & (col <= d), h, 0.0)
    a = jnp.dot(w_ref[...], h.astype(MATMUL_DTYPE),
                preferred_element_type=jnp.float32)
    z = (a[0 * c2out:1 * c2out, 0:d]
         + a[1 * c2out:2 * c2out, 1:d + 1]
         + a[2 * c2out:3 * c2out, 2:d + 2])
    pad = jnp.zeros((c2out, 1), jnp.float32)
    z2_ref[0] = jnp.concatenate([pad, z, pad], axis=1).astype(z2_ref.dtype)
    s_ref[0] = jnp.sum(z, axis=1, keepdims=True)
    ss_ref[0] = jnp.sum(z * z, axis=1, keepdims=True)


def _bn2_skip_silu_kernel(z2_ref, xs_ref, w3_ref, sc_ref, sh_ref, o_ref):
    """Pass C: BN2 affine + strided 1x1x1 skip conv (in-kernel matmul, broadcast
    over H/W via the row-expanded weight) + residual add + SiLU."""
    y = z2_ref[0].astype(jnp.float32) * sc_ref[...] + sh_ref[...]
    sk = jnp.dot(w3_ref[...], xs_ref[0], preferred_element_type=jnp.float32)
    r = y + sk
    o_ref[0] = (r * jax.nn.sigmoid(r)).astype(o_ref.dtype)


# --------------------------------- glue ----------------------------------------

def _fold_hw_taps(w, h_sz, w_sz):
    """(Cout, Cin, 3, 3, 3) -> (3, Cout*H*W, Cin*H*W): fold the kernel's H/W taps
    (including their zero padding) into a dense matrix over the (c, h, w) row
    space, leaving only the 3 D-taps.  Exact for any H, W; tiny here (H, W <= 2)."""
    cout, cin = w.shape[0], w.shape[1]
    hw = h_sz * w_sz
    wf = jnp.zeros((3, cout, hw, cin, hw), w.dtype)
    for hi in range(h_sz):
        for wi in range(w_sz):
            for kh in range(3):
                for kw in range(3):
                    hs, ws = hi + kh - 1, wi + kw - 1
                    if 0 <= hs < h_sz and 0 <= ws < w_sz:
                        tap = jnp.transpose(w[:, :, :, kh, kw], (2, 0, 1))
                        wf = wf.at[:, :, hi * w_sz + wi, :, hs * w_sz + ws].set(tap)
    return wf.reshape(3, cout * hw, cin * hw)


def _bn_scale_shift_rows(s, ss, gamma, beta, count, hw, extra_shift=None):
    """Reduce per-tile BN partials -> per-channel affine, expanded to (C*H*W, 1)."""
    tot = jnp.sum(s[:, :, 0], axis=0).reshape(-1, hw).sum(axis=1)
    tot2 = jnp.sum(ss[:, :, 0], axis=0).reshape(-1, hw).sum(axis=1)
    mean = tot / count
    var = tot2 / count - mean * mean
    scale = gamma * lax.rsqrt(var + BN_EPS)
    shift = beta - mean * scale
    if extra_shift is not None:
        shift = shift + extra_shift
    return (jnp.repeat(scale, hw).reshape(-1, 1),
            jnp.repeat(shift, hw).reshape(-1, 1))


def _per_sample_spec(rows, cols):
    return pl.BlockSpec((1, rows, cols), lambda i: (i, 0, 0))


def _resident_spec(shape2):
    return pl.BlockSpec(shape2, lambda i: (0, 0))


# --------------------------------- model ----------------------------------------

@jax.jit
def my_residual_conv3d_forward(x, params):
    """MyResidualConv3d forward (train-mode BN, Dropout as identity). NCDHW in/out."""
    w1, b1, g1, be1, w2, b2, g2, be2, w3, b3 = params
    del b1, b2                 # conv biases feeding a train-mode BatchNorm cancel exactly
    n, cin, d, hh, ww = x.shape
    cout = w1.shape[0]
    hw = hh * ww
    # torch's `sequential(x) + conv_3d(x)` only broadcasts when the stride-(1,2,2)
    # skip's H/W collapse to 1, i.e. H, W <= 2; same validity domain here.
    assert hh <= 2 and ww <= 2, "residual broadcast requires H, W <= 2 (as in torch)"
    c2in, c2out, dp = cin * hw, cout * hw, d + 2
    count = n * d * hw                                   # BN element count per channel

    # Single layout change of the activation: NCDHW -> (N, C*H*W, D+2) with zero
    # pad columns on D (they double as conv zero padding and as the tile halo).
    xt = jnp.transpose(x.astype(MATMUL_DTYPE), (0, 1, 3, 4, 2)).reshape(n, c2in, d)
    xt = jnp.pad(xt, ((0, 0), (0, 0), (1, 1)))           # (N, C2in, Dp)
    xs = xt[:, ::hw, :]                                  # rows (ci,0,0): skip-conv input

    # Folded weights (tiny, VMEM-resident across the whole grid).
    wf1 = _fold_hw_taps(w1, hh, ww).reshape(3 * c2out, c2in).astype(MATMUL_DTYPE)
    wf2 = _fold_hw_taps(w2, hh, ww).reshape(3 * c2out, c2out).astype(MATMUL_DTYPE)
    w3e = jnp.repeat(w3.reshape(cout, cin), hw, axis=0).astype(MATMUL_DTYPE)

    cparams = pltpu.CompilerParams(dimension_semantics=("parallel",),
                                   vmem_limit_bytes=_VMEM_LIMIT)
    z_shape = jax.ShapeDtypeStruct((n, c2out, dp), STORE_DTYPE)
    stat_shape = jax.ShapeDtypeStruct((n, c2out, 1), jnp.float32)
    z_spec = _per_sample_spec(c2out, dp)
    stat_spec = _per_sample_spec(c2out, 1)

    # -- pass A: Conv3d(Cin->Cout,3,1,1) + BN1 partial statistics -----------------
    y1, s1, ss1 = pl.pallas_call(
        _conv1_kernel,
        out_shape=(z_shape, stat_shape, stat_shape),
        grid_spec=pltpu.PrefetchScalarGridSpec(
            num_scalar_prefetch=0, grid=(n,),
            in_specs=[_per_sample_spec(c2in, dp), _resident_spec(wf1.shape)],
            out_specs=(z_spec, stat_spec, stat_spec)),
        compiler_params=cparams,
    )(xt, wf1)
    scale1, shift1 = _bn_scale_shift_rows(s1, ss1, g1, be1, count, hw)

    # -- pass B: fused BN1 affine + SiLU + Conv3d(Cout->Cout,3,1,1) + BN2 stats ----
    y2, s2, ss2 = pl.pallas_call(
        _bn1_silu_conv2_kernel,
        out_shape=(z_shape, stat_shape, stat_shape),
        grid_spec=pltpu.PrefetchScalarGridSpec(
            num_scalar_prefetch=0, grid=(n,),
            in_specs=[z_spec, _resident_spec(wf2.shape),
                      _resident_spec((c2out, 1)), _resident_spec((c2out, 1))],
            out_specs=(z_spec, stat_spec, stat_spec)),
        compiler_params=cparams,
    )(y1, wf2, scale1, shift1)
    scale2, shift2 = _bn_scale_shift_rows(s2, ss2, g2, be2, count, hw, extra_shift=b3)

    # -- pass C: fused BN2 affine + strided 1x1x1 skip conv + residual + SiLU ------
    out_p = pl.pallas_call(
        _bn2_skip_silu_kernel,
        out_shape=jax.ShapeDtypeStruct((n, c2out, dp), jnp.float32),
        grid_spec=pltpu.PrefetchScalarGridSpec(
            num_scalar_prefetch=0, grid=(n,),
            in_specs=[z_spec, _per_sample_spec(cin, dp), _resident_spec(w3e.shape),
                      _resident_spec((c2out, 1)), _resident_spec((c2out, 1))],
            out_specs=z_spec),
        compiler_params=cparams,
    )(y2, xs, w3e, scale2, shift2)

    # TODO(synk): nn.Dropout(0.15) training-mode masking (both dropout layers)
    # depends on torch's RNG stream; applied here as identity.
    out = out_p[:, :, 1:d + 1].reshape(n, cout, hh, ww, d)
    return jnp.transpose(out, (0, 1, 4, 2, 3))           # NCDHW


# --------------------------------- reference ------------------------------------

def reference_forward(x, params):
    """Pure-JAX/XLA reference of the module's training-mode forward (dropout =
    identity).  Conv inputs/weights and the stored intermediates are rounded to
    MATMUL_DTYPE exactly where the Pallas path rounds, so the comparison
    isolates kernel correctness.  Conv biases feeding a train-mode BN cancel
    exactly and are dropped on both sides."""
    w1, b1, g1, be1, w2, b2, g2, be2, w3, b3 = params
    del b1, b2
    dn = ("NCDHW", "OIDHW", "NCDHW")
    q = lambda a: a.astype(MATMUL_DTYPE).astype(jnp.float32)

    def bn_affine(y, g, b):
        mean = jnp.mean(y, axis=(0, 2, 3, 4))
        var = jnp.mean(y * y, axis=(0, 2, 3, 4)) - mean * mean
        scale = g * lax.rsqrt(var + BN_EPS)
        shift = b - mean * scale
        rs = lambda v: v.reshape(1, -1, 1, 1, 1)
        return rs(scale), rs(shift)

    y1 = lax.conv_general_dilated(q(x), q(w1), (1, 1, 1), [(1, 1)] * 3,
                                  dimension_numbers=dn)
    sc1, sh1 = bn_affine(y1, g1, be1)
    h1 = jax.nn.silu(q(y1) * sc1 + sh1)          # q(.) mirrors the bf16 storage of y1
    y2 = lax.conv_general_dilated(q(h1), q(w2), (1, 1, 1), [(1, 1)] * 3,
                                  dimension_numbers=dn)
    sc2, sh2 = bn_affine(y2, g2, be2)
    skip = lax.conv_general_dilated(q(x), q(w3), (1, 2, 2), [(0, 0)] * 3,
                                    dimension_numbers=dn)
    out = q(y2) * sc2 + sh2 + skip + b3.reshape(1, -1, 1, 1, 1)
    return jax.nn.silu(out)                      # residual broadcasts over strided (H, W)


if __name__ == "__main__":
    # Shapes consistent with the module: the skip conv has stride (1, 2, 2) and
    # its output is broadcast-added to the stride-1 branch, which torch only
    # allows when the strided H/W collapse to 1 -> H = W = 2.
    N, Cin, Cout, D, H, W = 2, 4, 8, 16, 2, 2

    key = jax.random.PRNGKey(0)
    kx, k1, k2, k3 = jax.random.split(key, 4)
    x = jax.random.normal(kx, (N, Cin, D, H, W), jnp.float32)

    def conv_init(k, cout, cin, ksz):
        # torch Conv3d default init: U(-1/sqrt(fan_in), 1/sqrt(fan_in)).
        kw_, kb_ = jax.random.split(k)
        bound = 1.0 / math.sqrt(cin * ksz ** 3)
        wgt = jax.random.uniform(kw_, (cout, cin, ksz, ksz, ksz), jnp.float32,
                                 -bound, bound)
        bia = jax.random.uniform(kb_, (cout,), jnp.float32, -bound, bound)
        return wgt, bia

    w1, b1 = conv_init(k1, Cout, Cin, 3)
    w2, b2 = conv_init(k2, Cout, Cout, 3)
    w3, b3 = conv_init(k3, Cout, Cin, 1)
    g1 = jnp.ones((Cout,), jnp.float32); be1 = jnp.zeros((Cout,), jnp.float32)
    g2 = jnp.ones((Cout,), jnp.float32); be2 = jnp.zeros((Cout,), jnp.float32)
    params = (w1, b1, g1, be1, w2, b2, g2, be2, w3, b3)

    out = jax.block_until_ready(my_residual_conv3d_forward(x, params))
    assert out.shape == (N, Cout, D, H, W), out.shape

    ref = reference_forward(x, params)
    max_err = float(jnp.max(jnp.abs(out - ref)))
    # bf16 requantization of the stored intermediates can flip an isolated value
    # by one bf16 ulp between the two computation orders; typical max error is
    # well below 1e-3.
    assert jnp.allclose(out, ref, atol=1e-2, rtol=1e-2), f"max abs err = {max_err}"

    print("KERNEL_OK")
</pallas_src>

<mosaic_0001>
module attributes {stable_mosaic.version = 11 : i64} {
  func.func @_conv1_kernel(%arg0: i32, %arg1: memref<1x16x18xbf16, #tpu.memory_space<vmem>>, %arg2: memref<96x16xbf16, #tpu.memory_space<vmem>>, %arg3: memref<1x32x18xbf16, #tpu.memory_space<vmem>>, %arg4: memref<1x32x1xf32, #tpu.memory_space<vmem>>, %arg5: memref<1x32x1xf32, #tpu.memory_space<vmem>>) attributes {dimension_semantics = [#tpu.dimension_semantics<parallel>], iteration_bounds = array<i64: 2>, scalar_prefetch = 0 : i64, scratch_operands = 0 : i64, tpu.core_type = #tpu.core_type<tc>, window_params = [{transform_indices = @transform_0, window_bounds = array<i64: 1, 16, 18>}, {pipeline_mode = #tpu.pipeline_mode<synchronous>, transform_indices = @transform_1, window_bounds = array<i64: 96, 16>}, {transform_indices = @transform_2, window_bounds = array<i64: 1, 32, 18>}, {transform_indices = @transform_3, window_bounds = array<i64: 1, 32, 1>}, {transform_indices = @transform_4, window_bounds = array<i64: 1, 32, 1>}]} {
    %c0 = arith.constant 0 : index
    %c0_0 = arith.constant 0 : index
    %0 = vector.load %arg2[%c0, %c0_0] : memref<96x16xbf16, #tpu.memory_space<vmem>>, vector<96x16xbf16>
    %c0_1 = arith.constant 0 : index
    %c0_2 = arith.constant 0 : index
    %c0_3 = arith.constant 0 : index
    %1 = vector.load %arg1[%c0_1, %c0_2, %c0_3] : memref<1x16x18xbf16, #tpu.memory_space<vmem>>, vector<1x16x18xbf16>
    %2 = vector.shape_cast %1 : vector<1x16x18xbf16> to vector<16x18xbf16>
    %cst = arith.constant dense<0.000000e+00> : vector<96x18xf32>
    %3 = tpu.matmul %0, %2, %cst {dimension_numbers = #tpu.dot_dimension_numbers<[1], [0], [0], [1], [0, 0, 1, 1], [], []>} : vector<96x16xbf16>, vector<16x18xbf16>, vector<96x18xf32> -> vector<96x18xf32>
    %4 = vector.extract_strided_slice %3 {offsets = [0, 0], sizes = [32, 16], strides = [1, 1]} : vector<96x18xf32> to vector<32x16xf32>
    %5 = vector.extract_strided_slice %3 {offsets = [32, 1], sizes = [32, 16], strides = [1, 1]} : vector<96x18xf32> to vector<32x16xf32>
    %6 = arith.addf %4, %5 : vector<32x16xf32>
    %7 = vector.extract_strided_slice %3 {offsets = [64, 2], sizes = [32, 16], strides = [1, 1]} : vector<96x18xf32> to vector<32x16xf32>
    %8 = arith.addf %6, %7 : vector<32x16xf32>
    %cst_4 = arith.constant 0.000000e+00 : f32
    %9 = vector.broadcast %cst_4 : f32 to vector<32x1xf32>
    %10 = tpu.concatenate %9, %8, %9 in 1 : vector<32x1xf32>, vector<32x16xf32>, vector<32x1xf32> -> vector<32x18xf32>
    %11 = arith.truncf %10 : vector<32x18xf32> to vector<32x18xbf16>
    %c0_5 = arith.constant 0 : index
    %c0_6 = arith.constant 0 : index
    %c0_7 = arith.constant 0 : index
    %12 = vector.load %arg3[%c0_5, %c0_6, %c0_7] : memref<1x32x18xbf16, #tpu.memory_space<vmem>>, vector<1x32x18xbf16>
    %13 = vector.shape_cast %12 : vector<1x32x18xbf16> to vector<32x18xbf16>
    %14 = vector.shape_cast %11 : vector<32x18xbf16> to vector<1x32x18xbf16>
    tpu.vector_store %arg3[%c0_5, %c0_6, %c0_7], %14 {strides = array<i32>} : memref<1x32x18xbf16, #tpu.memory_space<vmem>>, vector<1x32x18xbf16>,
    %cst_8 = arith.constant dense<0.000000e+00> : vector<32xf32>
    %15 = vector.multi_reduction <add>, %8, %cst_8 [1] : vector<32x16xf32> to vector<32xf32>
    %16 = vector.shape_cast %15 : vector<32xf32> to vector<32x1xf32>
    %c0_9 = arith.constant 0 : index
    %c0_10 = arith.constant 0 : index
    %c0_11 = arith.constant 0 : index
    %17 = vector.load %arg4[%c0_9, %c0_10, %c0_11] : memref<1x32x1xf32, #tpu.memory_space<vmem>>, vector<1x32x1xf32>
    %18 = vector.shape_cast %17 : vector<1x32x1xf32> to vector<32x1xf32>
    %19 = vector.shape_cast %16 : vector<32x1xf32> to vector<1x32x1xf32>
    tpu.vector_store %arg4[%c0_9, %c0_10, %c0_11], %19 {strides = array<i32>} : memref<1x32x1xf32, #tpu.memory_space<vmem>>, vector<1x32x1xf32>,
    %20 = arith.mulf %8, %8 : vector<32x16xf32>
    %cst_12 = arith.constant dense<0.000000e+00> : vector<32xf32>
    %21 = vector.multi_reduction <add>, %20, %cst_12 [1] : vector<32x16xf32> to vector<32xf32>
    %22 = vector.shape_cast %21 : vector<32xf32> to vector<32x1xf32>
    %c0_13 = arith.constant 0 : index
    %c0_14 = arith.constant 0 : index
    %c0_15 = arith.constant 0 : index
    %23 = vector.load %arg5[%c0_13, %c0_14, %c0_15] : memref<1x32x1xf32, #tpu.memory_space<vmem>>, vector<1x32x1xf32>
    %24 = vector.shape_cast %23 : vector<1x32x1xf32> to vector<32x1xf32>
    %25 = vector.shape_cast %22 : vector<32x1xf32> to vector<1x32x1xf32>
    tpu.vector_store %arg5[%c0_13, %c0_14, %c0_15], %25 {strides = array<i32>} : memref<1x32x1xf32, #tpu.memory_space<vmem>>, vector<1x32x1xf32>,
    return
  }
  func.func @transform_0(%arg0: i32) -> (i32, i32, i32) {
    %c0_i32 = arith.constant 0 : i32
    %c0_i32_0 = arith.constant 0 : i32
    %c0_i32_1 = arith.constant 0 : i32
    return %arg0, %c0_i32, %c0_i32_0 : i32, i32, i32
  }
  func.func @transform_1(%arg0: i32) -> (i32, i32) {
    %c0_i32 = arith.constant 0 : i32
    %c0_i32_0 = arith.constant 0 : i32
    %c0_i32_1 = arith.constant 0 : i32
    return %c0_i32, %c0_i32_0 : i32, i32
  }
  func.func @transform_2(%arg0: i32) -> (i32, i32, i32) {
    %c0_i32 = arith.constant 0 : i32
    %c0_i32_0 = arith.constant 0 : i32
    %c0_i32_1 = arith.constant 0 : i32
    return %arg0, %c0_i32, %c0_i32_0 : i32, i32, i32
  }
  func.func @transform_3(%arg0: i32) -> (i32, i32, i32) {
    %c0_i32 = arith.constant 0 : i32
    %c0_i32_0 = arith.constant 0 : i32
    %c0_i32_1 = arith.constant 0 : i32
    return %arg0, %c0_i32, %c0_i32_0 : i32, i32, i32
  }
  func.func @transform_4(%arg0: i32) -> (i32, i32, i32) {
    %c0_i32 = arith.constant 0 : i32
    %c0_i32_0 = arith.constant 0 : i32
    %c0_i32_1 = arith.constant 0 : i32
    return %arg0, %c0_i32, %c0_i32_0 : i32, i32, i32
  }
}

module attributes {stable_mosaic.version = 11 : i64} {
  func.func @_bn1_silu_conv2_kernel(%arg0: i32, %arg1: memref<1x32x18xbf16, #tpu.memory_space<vmem>>, %arg2: memref<96x32xbf16, #tpu.memory_space<vmem>>, %arg3: memref<32x1xf32, #tpu.memory_space<vmem>>, %arg4: memref<32x1xf32, #tpu.memory_space<vmem>>, %arg5: memref<1x32x18xbf16, #tpu.memory_space<vmem>>, %arg6: memref<1x32x1xf32, #tpu.memory_space<vmem>>, %arg7: memref<1x32x1xf32, #tpu.memory_space<vmem>>) attributes {dimension_semantics = [#tpu.dimension_semantics<parallel>], iteration_bounds = array<i64: 2>, scalar_prefetch = 0 : i64, scratch_operands = 0 : i64, tpu.core_type = #tpu.core_type<tc>, window_params = [{transform_indices = @transform_0, window_bounds = array<i64: 1, 32, 18>}, {pipeline_mode = #tpu.pipeline_mode<synchronous>, transform_indices = @transform_1, window_bounds = array<i64: 96, 32>}, {pipeline_mode = #tpu.pipeline_mode<synchronous>, transform_indices = @transform_2, window_bounds = array<i64: 32, 1>}, {pipeline_mode = #tpu.pipeline_mode<synchronous>, transform_indices = @transform_3, window_bounds = array<i64: 32, 1>}, {transform_indices = @transform_4, window_bounds = array<i64: 1, 32, 18>}, {transform_indices = @transform_5, window_bounds = array<i64: 1, 32, 1>}, {transform_indices = @transform_6, window_bounds = array<i64: 1, 32, 1>}]} {
    %c0 = arith.constant 0 : index
    %c0_0 = arith.constant 0 : index
    %c0_1 = arith.constant 0 : index
    %0 = vector.load %arg1[%c0, %c0_0, %c0_1] : memref<1x32x18xbf16, #tpu.memory_space<vmem>>, vector<1x32x18xbf16>
    %1 = vector.shape_cast %0 : vector<1x32x18xbf16> to vector<32x18xbf16>
    %2 = arith.extf %1 : vector<32x18xbf16> to vector<32x18xf32>
    %c0_2 = arith.constant 0 : index
    %c0_3 = arith.constant 0 : index
    %3 = vector.load %arg3[%c0_2, %c0_3] : memref<32x1xf32, #tpu.memory_space<vmem>>, vector<32x1xf32>
    %4 = vector.broadcast %3 : vector<32x1xf32> to vector<32x18xf32>
    %5 = arith.mulf %2, %4 : vector<32x18xf32>
    %c0_4 = arith.constant 0 : index
    %c0_5 = arith.constant 0 : index
    %6 = vector.load %arg4[%c0_4, %c0_5] : memref<32x1xf32, #tpu.memory_space<vmem>>, vector<32x1xf32>
    %7 = vector.broadcast %6 : vector<32x1xf32> to vector<32x18xf32>
    %8 = arith.addf %5, %7 : vector<32x18xf32>
    %9 = arith.negf %8 : vector<32x18xf32>
    %10 = math.exp %9 : vector<32x18xf32>
    %cst = arith.constant 1.000000e+00 : f32
    %11 = vector.broadcast %cst : f32 to vector<32x18xf32>
    %12 = arith.addf %11, %10 : vector<32x18xf32>
    %13 = arith.divf %11, %12 : vector<32x18xf32>
    %14 = arith.mulf %8, %13 : vector<32x18xf32>
    %15 = tpu.iota {dimensions = array<i32: 1>} : vector<1x18xi32>
    %c1_i32 = arith.constant 1 : i32
    %16 = vector.broadcast %c1_i32 : i32 to vector<1x18xi32>
    %17 = arith.cmpi sge, %15, %16 : vector<1x18xi32>
    %c16_i32 = arith.constant 16 : i32
    %18 = vector.broadcast %c16_i32 : i32 to vector<1x18xi32>
    %19 = arith.cmpi sle, %15, %18 : vector<1x18xi32>
    %20 = arith.andi %17, %19 : vector<1x18xi1>
    %cst_6 = arith.constant 0.000000e+00 : f32
    %21 = vector.shape_cast %20 : vector<1x18xi1> to vector<1x18xi1>
    %22 = vector.broadcast %21 : vector<1x18xi1> to vector<32x18xi1>
    %23 = vector.broadcast %cst_6 : f32 to vector<32x18xf32>
    %24 = arith.select %22, %14, %23 : vector<32x18xi1>, vector<32x18xf32>
    %c0_7 = arith.constant 0 : index
    %c0_8 = arith.constant 0 : index
    %25 = vector.load %arg2[%c0_7, %c0_8] : memref<96x32xbf16, #tpu.memory_space<vmem>>, vector<96x32xbf16>
    %26 = arith.truncf %24 : vector<32x18xf32> to vector<32x18xbf16>
    %cst_9 = arith.constant dense<0.000000e+00> : vector<96x18xf32>
    %27 = tpu.matmul %25, %26, %cst_9 {dimension_numbers = #tpu.dot_dimension_numbers<[1], [0], [0], [1], [0, 0, 1, 1], [], []>} : vector<96x32xbf16>, vector<32x18xbf16>, vector<96x18xf32> -> vector<96x18xf32>
    %28 = vector.extract_strided_slice %27 {offsets = [0, 0], sizes = [32, 16], strides = [1, 1]} : vector<96x18xf32> to vector<32x16xf32>
    %29 = vector.extract_strided_slice %27 {offsets = [32, 1], sizes = [32, 16], strides = [1, 1]} : vector<96x18xf32> to vector<32x16xf32>
    %30 = arith.addf %28, %29 : vector<32x16xf32>
    %31 = vector.extract_strided_slice %27 {offsets = [64, 2], sizes = [32, 16], strides = [1, 1]} : vector<96x18xf32> to vector<32x16xf32>
    %32 = arith.addf %30, %31 : vector<32x16xf32>
    %cst_10 = arith.constant 0.000000e+00 : f32
    %33 = vector.broadcast %cst_10 : f32 to vector<32x1xf32>
    %34 = tpu.concatenate %33, %32, %33 in 1 : vector<32x1xf32>, vector<32x16xf32>, vector<32x1xf32> -> vector<32x18xf32>
    %35 = arith.truncf %34 : vector<32x18xf32> to vector<32x18xbf16>
    %c0_11 = arith.constant 0 : index
    %c0_12 = arith.constant 0 : index
    %c0_13 = arith.constant 0 : index
    %36 = vector.load %arg5[%c0_11, %c0_12, %c0_13] : memref<1x32x18xbf16, #tpu.memory_space<vmem>>, vector<1x32x18xbf16>
    %37 = vector.shape_cast %36 : vector<1x32x18xbf16> to vector<32x18xbf16>
    %38 = vector.shape_cast %35 : vector<32x18xbf16> to vector<1x32x18xbf16>
    tpu.vector_store %arg5[%c0_11, %c0_12, %c0_13], %38 {strides = array<i32>} : memref<1x32x18xbf16, #tpu.memory_space<vmem>>, vector<1x32x18xbf16>,
    %cst_14 = arith.constant dense<0.000000e+00> : vector<32xf32>
    %39 = vector.multi_reduction <add>, %32, %cst_14 [1] : vector<32x16xf32> to vector<32xf32>
    %40 = vector.shape_cast %39 : vector<32xf32> to vector<32x1xf32>
    %c0_15 = arith.constant 0 : index
    %c0_16 = arith.constant 0 : index
    %c0_17 = arith.constant 0 : index
    %41 = vector.load %arg6[%c0_15, %c0_16, %c0_17] : memref<1x32x1xf32, #tpu.memory_space<vmem>>, vector<1x32x1xf32>
    %42 = vector.shape_cast %41 : vector<1x32x1xf32> to vector<32x1xf32>
    %43 = vector.shape_cast %40 : vector<32x1xf32> to vector<1x32x1xf32>
    tpu.vector_store %arg6[%c0_15, %c0_16, %c0_17], %43 {strides = array<i32>} : memref<1x32x1xf32, #tpu.memory_space<vmem>>, vector<1x32x1xf32>,
    %44 = arith.mulf %32, %32 : vector<32x16xf32>
    %cst_18 = arith.constant dense<0.000000e+00> : vector<32xf32>
    %45 = vector.multi_reduction <add>, %44, %cst_18 [1] : vector<32x16xf32> to vector<32xf32>
    %46 = vector.shape_cast %45 : vector<32xf32> to vector<32x1xf32>
    %c0_19 = arith.constant 0 : index
    %c0_20 = arith.constant 0 : index
    %c0_21 = arith.constant 0 : index
    %47 = vector.load %arg7[%c0_19, %c0_20, %c0_21] : memref<1x32x1xf32, #tpu.memory_space<vmem>>, vector<1x32x1xf32>
    %48 = vector.shape_cast %47 : vector<1x32x1xf32> to vector<32x1xf32>
    %49 = vector.shape_cast %46 : vector<32x1xf32> to vector<1x32x1xf32>
    tpu.vector_store %arg7[%c0_19, %c0_20, %c0_21], %49 {strides = array<i32>} : memref<1x32x1xf32, #tpu.memory_space<vmem>>, vector<1x32x1xf32>,
    return
  }
  func.func @transform_0(%arg0: i32) -> (i32, i32, i32) {
    %c0_i32 = arith.constant 0 : i32
    %c0_i32_0 = arith.constant 0 : i32
    %c0_i32_1 = arith.constant 0 : i32
    return %arg0, %c0_i32, %c0_i32_0 : i32, i32, i32
  }
  func.func @transform_1(%arg0: i32) -> (i32, i32) {
    %c0_i32 = arith.constant 0 : i32
    %c0_i32_0 = arith.constant 0 : i32
    %c0_i32_1 = arith.constant 0 : i32
    return %c0_i32, %c0_i32_0 : i32, i32
  }
  func.func @transform_2(%arg0: i32) -> (i32, i32) {
    %c0_i32 = arith.constant 0 : i32
    %c0_i32_0 = arith.constant 0 : i32
    %c0_i32_1 = arith.constant 0 : i32
    return %c0_i32, %c0_i32_0 : i32, i32
  }
  func.func @transform_3(%arg0: i32) -> (i32, i32) {
    %c0_i32 = arith.constant 0 : i32
    %c0_i32_0 = arith.constant 0 : i32
    %c0_i32_1 = arith.constant 0 : i32
    return %c0_i32, %c0_i32_0 : i32, i32
  }
  func.func @transform_4(%arg0: i32) -> (i32, i32, i32) {
    %c0_i32 = arith.constant 0 : i32
    %c0_i32_0 = arith.constant 0 : i32
    %c0_i32_1 = arith.constant 0 : i32
    return %arg0, %c0_i32, %c0_i32_0 : i32, i32, i32
  }
  func.func @transform_5(%arg0: i32) -> (i32, i32, i32) {
    %c0_i32 = arith.constant 0 : i32
    %c0_i32_0 = arith.constant 0 : i32
    %c0_i32_1 = arith.constant 0 : i32
    return %arg0, %c0_i32, %c0_i32_0 : i32, i32, i32
  }
  func.func @transform_6(%arg0: i32) -> (i32, i32, i32) {
    %c0_i32 = arith.constant 0 : i32
    %c0_i32_0 = arith.constant 0 : i32
    %c0_i32_1 = arith.constant 0 : i32
    return %arg0, %c0_i32, %c0_i32_0 : i32, i32, i32
  }
}

module attributes {stable_mosaic.version = 11 : i64} {
  func.func @_bn2_skip_silu_kernel(%arg0: i32, %arg1: memref<1x32x18xbf16, #tpu.memory_space<vmem>>, %arg2: memref<1x4x18xbf16, #tpu.memory_space<vmem>>, %arg3: memref<32x4xbf16, #tpu.memory_space<vmem>>, %arg4: memref<32x1xf32, #tpu.memory_space<vmem>>, %arg5: memref<32x1xf32, #tpu.memory_space<vmem>>, %arg6: memref<1x32x18xf32, #tpu.memory_space<vmem>>) attributes {dimension_semantics = [#tpu.dimension_semantics<parallel>], iteration_bounds = array<i64: 2>, scalar_prefetch = 0 : i64, scratch_operands = 0 : i64, tpu.core_type = #tpu.core_type<tc>, window_params = [{transform_indices = @transform_0, window_bounds = array<i64: 1, 32, 18>}, {transform_indices = @transform_1, window_bounds = array<i64: 1, 4, 18>}, {pipeline_mode = #tpu.pipeline_mode<synchronous>, transform_indices = @transform_2, window_bounds = array<i64: 32, 4>}, {pipeline_mode = #tpu.pipeline_mode<synchronous>, transform_indices = @transform_3, window_bounds = array<i64: 32, 1>}, {pipeline_mode = #tpu.pipeline_mode<synchronous>, transform_indices = @transform_4, window_bounds = array<i64: 32, 1>}, {transform_indices = @transform_5, window_bounds = array<i64: 1, 32, 18>}]} {
    %c0 = arith.constant 0 : index
    %c0_0 = arith.constant 0 : index
    %c0_1 = arith.constant 0 : index
    %0 = vector.load %arg1[%c0, %c0_0, %c0_1] : memref<1x32x18xbf16, #tpu.memory_space<vmem>>, vector<1x32x18xbf16>
    %1 = vector.shape_cast %0 : vector<1x32x18xbf16> to vector<32x18xbf16>
    %2 = arith.extf %1 : vector<32x18xbf16> to vector<32x18xf32>
    %c0_2 = arith.constant 0 : index
    %c0_3 = arith.constant 0 : index
    %3 = vector.load %arg4[%c0_2, %c0_3] : memref<32x1xf32, #tpu.memory_space<vmem>>, vector<32x1xf32>
    %4 = vector.broadcast %3 : vector<32x1xf32> to vector<32x18xf32>
    %5 = arith.mulf %2, %4 : vector<32x18xf32>
    %c0_4 = arith.constant 0 : index
    %c0_5 = arith.constant 0 : index
    %6 = vector.load %arg5[%c0_4, %c0_5] : memref<32x1xf32, #tpu.memory_space<vmem>>, vector<32x1xf32>
    %7 = vector.broadcast %6 : vector<32x1xf32> to vector<32x18xf32>
    %8 = arith.addf %5, %7 : vector<32x18xf32>
    %c0_6 = arith.constant 0 : index
    %c0_7 = arith.constant 0 : index
    %9 = vector.load %arg3[%c0_6, %c0_7] : memref<32x4xbf16, #tpu.memory_space<vmem>>, vector<32x4xbf16>
    %c0_8 = arith.constant 0 : index
    %c0_9 = arith.constant 0 : index
    %c0_10 = arith.constant 0 : index
    %10 = vector.load %arg2[%c0_8, %c0_9, %c0_10] : memref<1x4x18xbf16, #tpu.memory_space<vmem>>, vector<1x4x18xbf16>
    %11 = vector.shape_cast %10 : vector<1x4x18xbf16> to vector<4x18xbf16>
    %cst = arith.constant dense<0.000000e+00> : vector<32x18xf32>
    %12 = tpu.matmul %9, %11, %cst {dimension_numbers = #tpu.dot_dimension_numbers<[1], [0], [0], [1], [0, 0, 1, 1], [], []>} : vector<32x4xbf16>, vector<4x18xbf16>, vector<32x18xf32> -> vector<32x18xf32>
    %13 = arith.addf %8, %12 : vector<32x18xf32>
    %14 = arith.negf %13 : vector<32x18xf32>
    %15 = math.exp %14 : vector<32x18xf32>
    %cst_11 = arith.constant 1.000000e+00 : f32
    %16 = vector.broadcast %cst_11 : f32 to vector<32x18xf32>
    %17 = arith.addf %16, %15 : vector<32x18xf32>
    %18 = arith.divf %16, %17 : vector<32x18xf32>
    %19 = arith.mulf %13, %18 : vector<32x18xf32>
    %c0_12 = arith.constant 0 : index
    %c0_13 = arith.constant 0 : index
    %c0_14 = arith.constant 0 : index
    %20 = vector.load %arg6[%c0_12, %c0_13, %c0_14] : memref<1x32x18xf32, #tpu.memory_space<vmem>>, vector<1x32x18xf32>
    %21 = vector.shape_cast %20 : vector<1x32x18xf32> to vector<32x18xf32>
    %22 = vector.shape_cast %19 : vector<32x18xf32> to vector<1x32x18xf32>
    tpu.vector_store %arg6[%c0_12, %c0_13, %c0_14], %22 {strides = array<i32>} : memref<1x32x18xf32, #tpu.memory_space<vmem>>, vector<1x32x18xf32>,
    return
  }
  func.func @transform_0(%arg0: i32) -> (i32, i32, i32) {
    %c0_i32 = arith.constant 0 : i32
    %c0_i32_0 = arith.constant 0 : i32
    %c0_i32_1 = arith.constant 0 : i32
    return %arg0, %c0_i32, %c0_i32_0 : i32, i32, i32
  }
  func.func @transform_1(%arg0: i32) -> (i32, i32, i32) {
    %c0_i32 = arith.constant 0 : i32
    %c0_i32_0 = arith.constant 0 : i32
    %c0_i32_1 = arith.constant 0 : i32
    return %arg0, %c0_i32, %c0_i32_0 : i32, i32, i32
  }
  func.func @transform_2(%arg0: i32) -> (i32, i32) {
    %c0_i32 = arith.constant 0 : i32
    %c0_i32_0 = arith.constant 0 : i32
    %c0_i32_1 = arith.constant 0 : i32
    return %c0_i32, %c0_i32_0 : i32, i32
  }
  func.func @transform_3(%arg0: i32) -> (i32, i32) {
    %c0_i32 = arith.constant 0 : i32
    %c0_i32_0 = arith.constant 0 : i32
    %c0_i32_1 = arith.constant 0 : i32
    return %c0_i32, %c0_i32_0 : i32, i32
  }
  func.func @transform_4(%arg0: i32) -> (i32, i32) {
    %c0_i32 = arith.constant 0 : i32
    %c0_i32_0 = arith.constant 0 : i32
    %c0_i32_1 = arith.constant 0 : i32
    return %c0_i32, %c0_i32_0 : i32, i32
  }
  func.func @transform_5(%arg0: i32) -> (i32, i32, i32) {
    %c0_i32 = arith.constant 0 : i32
    %c0_i32_0 = arith.constant 0 : i32
    %c0_i32_1 = arith.constant 0 : i32
    return %arg0, %c0_i32, %c0_i32_0 : i32, i32, i32
  }
}

</mosaic_0001>

<llo_original>
// kernel: my_residual_conv3d_forward.3
$region0: #{my_residual_conv3d_forward.3}
  #allocation0 [shape = 'u32[]', space=smem, size = 0x4, offset = 0x4, fixed_abs, tag = 'smem constant byte address 0x4 - core index']
  #allocation1 [shape = 'u32[144,128]{1,0:T(1,128)}', space=vmem, size = 0x12000, scoped, tag = 'internal scratch']
  %s0 = inlined_call_operand.vmem [shape: bf16[2,16,18], index: 0, kind: input, shape index: {}]
  %s1 = inlined_call_operand.vmem [shape: bf16[96,16], index: 1, kind: input, shape index: {}]
  %s2 = inlined_call_operand.vmem [shape: bf16[2,32,18], index: 2, kind: output, shape index: {0}]
  %s3 = inlined_call_operand.vmem [shape: f32[2,32,1], index: 3, kind: output, shape index: {1}]
  %s4 = inlined_call_operand.vmem [shape: f32[2,32,1], index: 4, kind: output, shape index: {2}]
  %5 = xla_tuple %s2, %s3, %s4
  %s6 = sld [smem:[#allocation0]]
  $region57: #{my_residual_conv3d_forward.3} parent=0
    _
  %s8 = ssub.s32 1, %s6
  %s9 = scalar_select 0, %s8, %s6
  loop: start=0, step=1, limit=4
  $region2: #{my_residual_conv3d_forward.3} parent=0 // loop_pre_header
    _
  $region3: #{my_residual_conv3d_forward.3} parent=0 // loop_header
    %s11 = sphi 0, %s15
    %p12 = scmp.ge.s32.totalorder %s11, 4
    %s21 = sphi 0, %s23
    %s24 = sphi 0, %s21
    %s25 = sphi 0, %s24
    %s41 = sphi 0, %s25
    %s45 = sphi 0, %s45
    %s47 = sphi 0, %s45
    %s48 = sphi 0, %s47
    %s62 = sphi 0, %s48
    %s68 = sphi 0, %s70
    %s71 = sphi 0, %s68
    %s72 = sphi 0, %s71
    %s88 = sphi 0, %s72
    %s94 = sphi 0, %s96
    %s97 = sphi 0, %s94
    %s98 = sphi 0, %s97
    %s114 = sphi 0, %s98
    %s120 = sphi 0, %s122
    %s123 = sphi 0, %s120
    %s124 = sphi 0, %s123
    %s140 = sphi 0, %s124
  $region4: #{my_residual_conv3d_forward.3} parent=0 // loop_header_branch
    %14 = sbr.rel (%p12) target = $region8
  $region5: #{my_residual_conv3d_forward.3} parent=0 // loop_body
    %s16 = ssub.s32 %s11, 1
    %s17 = ssub.s32 %s11, 2
    %s18 = sadd.s32 %s11, 1
    %s19 = ssub.s32 %s11, %s18
    %p20 = scmp.eq.s32.totalorder %s19, 0
    %s22 = sadd.s32 %s21, 1
    %s23 = scalar_select %p20, %s21, %s22
    %p26 = pneg %p20
    %p27 = scmp.eq.s32.totalorder %s11, 1
    %p28 = por %p26, %p27
    %p29 = scmp.ne.s32.totalorder %s21, %s24
    %p30 = scmp.eq.s32.totalorder %s11, 0
    %p31 = por %p29, %p30
    %p32 = scmp.ne.s32.totalorder %s21, %s24
    %p33 = scmp.eq.s32.totalorder %s16, 1
    %p34 = por %p32, %p33
    %p35 = scmp.ne.s32.totalorder %s24, %s25
    %p36 = scmp.eq.s32.totalorder %s16, 0
    %p37 = por %p35, %p36
    %p38 = scmp.ne.s32.totalorder %s24, %s25
    %p39 = scmp.eq.s32.totalorder %s17, 1
    %p40 = por %p38, %p39
    %p42 = scmp.ne.s32.totalorder %s25, %s41
    %p43 = scmp.eq.s32.totalorder %s17, 0
    %p44 = por %p42, %p43
    %s46 = sadd.s32 %s45, 1
    %p49 = scmp.eq.s32.totalorder %s11, 1
    %p50 = scmp.ne.s32.totalorder %s45, %s47
    %p51 = scmp.eq.s32.totalorder %s11, 0
    %p52 = por %p50, %p51
    %p53 = scmp.ne.s32.totalorder %s45, %s47
    %p54 = scmp.eq.s32.totalorder %s16, 1
    %p55 = por %p53, %p54
    %p56 = scmp.ne.s32.totalorder %s47, %s48
    %p57 = scmp.eq.s32.totalorder %s16, 0
    %p58 = por %p56, %p57
    %p59 = scmp.ne.s32.totalorder %s47, %s48
    %p60 = scmp.eq.s32.totalorder %s17, 1
    %p61 = por %p59, %p60
    %p63 = scmp.ne.s32.totalorder %s48, %s62
    %p64 = scmp.eq.s32.totalorder %s17, 0
    %p65 = por %p63, %p64
    %s66 = ssub.s32 %s11, %s18
    %p67 = scmp.eq.s32.totalorder %s66, 0
    %s69 = sadd.s32 %s68, 1
    %s70 = scalar_select %p67, %s68, %s69
    %p73 = pneg %p67
    %p74 = scmp.eq.s32.totalorder %s11, 1
    %p75 = por %p73, %p74
    %p76 = scmp.ne.s32.totalorder %s68, %s71
    %p77 = scmp.eq.s32.totalorder %s11, 0
    %p78 = por %p76, %p77
    %p79 = scmp.ne.s32.totalorder %s68, %s71
    %p80 = scmp.eq.s32.totalorder %s16, 1
    %p81 = por %p79, %p80
    %p82 = scmp.ne.s32.totalorder %s71, %s72
    %p83 = scmp.eq.s32.totalorder %s16, 0
    %p84 = por %p82, %p83
    %p85 = scmp.ne.s32.totalorder %s71, %s72
    %p86 = scmp.eq.s32.totalorder %s17, 1
    %p87 = por %p85, %p86
    %p89 = scmp.ne.s32.totalorder %s72, %s88
    %p90 = scmp.eq.s32.totalorder %s17, 0
    %p91 = por %p89, %p90
    %s92 = ssub.s32 %s11, %s18
    %p93 = scmp.eq.s32.totalorder %s92, 0
    %s95 = sadd.s32 %s94, 1
    %s96 = scalar_select %p93, %s94, %s95
    %p99 = pneg %p93
    %p100 = scmp.eq.s32.totalorder %s11, 1
    %p101 = por %p99, %p100
    %p102 = scmp.ne.s32.totalorder %s94, %s97
    %p103 = scmp.eq.s32.totalorder %s11, 0
    %p104 = por %p102, %p103
    %p105 = scmp.ne.s32.totalorder %s94, %s97
    %p106 = scmp.eq.s32.totalorder %s16, 1
    %p107 = por %p105, %p106
    %p108 = scmp.ne.s32.totalorder %s97, %s98
    %p109 = scmp.eq.s32.totalorder %s16, 0
    %p110 = por %p108, %p109
    %p111 = scmp.ne.s32.totalorder %s97, %s98
    %p112 = scmp.eq.s32.totalorder %s17, 1
    %p113 = por %p111, %p112
    %p115 = scmp.ne.s32.totalorder %s98, %s114
    %p116 = scmp.eq.s32.totalorder %s17, 0
    %p117 = por %p115, %p116
    %s118 = ssub.s32 %s11, %s18
    %p119 = scmp.eq.s32.totalorder %s118, 0
    %s121 = sadd.s32 %s120, 1
    %s122 = scalar_select %p119, %s120, %s121
    %p125 = pneg %p119
    %p126 = scmp.eq.s32.totalorder %s11, 1
    %p127 = por %p125, %p126
    %p128 = scmp.ne.s32.totalorder %s120, %s123
    %p129 = scmp.eq.s32.totalorder %s11, 0
    %p130 = por %p128, %p129
    %p131 = scmp.ne.s32.totalorder %s120, %s123
    %p132 = scmp.eq.s32.totalorder %s16, 1
    %p133 = por %p131, %p132
    %p134 = scmp.ne.s32.totalorder %s123, %s124
    %p135 = scmp.eq.s32.totalorder %s16, 0
    %p136 = por %p134, %p135
    %p137 = scmp.ne.s32.totalorder %s123, %s124
    %p138 = scmp.eq.s32.totalorder %s17, 1
    %p139 = por %p137, %p138
    %p141 = scmp.ne.s32.totalorder %s124, %s140
    %p142 = scmp.eq.s32.totalorder %s17, 0
    %p143 = por %p141, %p142
    %p144 = scmp.le.s32.totalorder 1, %s11
    %p145 = scmp.lt.s32.totalorder %s11, 3
    %p146 = pnand %p144, %p145
    %p147 = pneg %p146
    // Predicated region
    $region9: #{my_residual_conv3d_forward.3} parent=5 // pred_check
      _
    $region10: #{my_residual_conv3d_forward.3} parent=5 // pred_check_branch
      %149 = sbr.rel (%p146) target = $region12
    $region11: #{my_residual_conv3d_forward.3} parent=5 // pred_region
      %s150 = ssub.s32 %s11, 1
      // Predicated region
      $region13: #{my_residual_conv3d_forward.3} parent=11 // pred_check
        %p151 = pneg %p58
      $region14: #{my_residual_conv3d_forward.3} parent=11 // pred_check_branch
        %153 = sbr.rel (%p151) target = $region16
      $region15: #{my_residual_conv3d_forward.3} parent=11 // pred_region
        _
      $region16: #{my_residual_conv3d_forward.3} parent=11 // pred_fallthru
        _
    $region12: #{my_residual_conv3d_forward.3} parent=5 // pred_fallthru
      _
    %p154 = scmp.lt.s32.totalorder %s11, 2
    // Predicated region
    $region17: #{my_residual_conv3d_forward.3} parent=5 // pred_check
      %p155 = pneg %p154
    $region18: #{my_residual_conv3d_forward.3} parent=5 // pred_check_branch
      %157 = sbr.rel (%p155) target = $region20
    $region19: #{my_residual_conv3d_forward.3} parent=5 // pred_region
      // Predicated region
      $region21: #{my_residual_conv3d_forward.3} parent=19 // pred_check
        %p158 = pneg %p31
      $region22: #{my_residual_conv3d_forward.3} parent=19 // pred_check_branch
        %160 = sbr.rel (%p158) target = $region24
      $region23: #{my_residual_conv3d_forward.3} parent=19 // pred_region
        %p161 = scmp.lt.s32.totalorder %s11, 1
        %s162 = scalar_select %p161, %s11, 1
        %s163 = smul.addr %s162, 2
        %s164 = smul.addr %s163, 4
        %s165 = scalar_lea.vmem %s0, %s164
      $region24: #{my_residual_conv3d_forward.3} parent=19 // pred_fallthru
        _
    $region20: #{my_residual_conv3d_forward.3} parent=5 // pred_fallthru
      _
    %p166 = scmp.le.s32.totalorder 1, %s11
    %p167 = scmp.lt.s32.totalorder %s11, 3
    %p168 = pnand %p166, %p167
    %p169 = pneg %p168
    // Predicated region
    $region25: #{my_residual_conv3d_forward.3} parent=5 // pred_check
      _
    $region26: #{my_residual_conv3d_forward.3} parent=5 // pred_check_branch
      %171 = sbr.rel (%p168) target = $region28
    $region27: #{my_residual_conv3d_forward.3} parent=5 // pred_region
      %s172 = ssub.s32 %s11, 1
      %p173 = scmp.lt.s32.totalorder %s16, 1
      %s174 = scalar_select %p173, %s16, 1
      %s175 = smul.addr %s174, 2
      %s176 = smul.addr %s175, 4
      %s177 = scalar_lea.vmem %s0, %s176
      %p178 = pneg %p37
      %p179 = pneg %p34
      %p180 = pneg %p58
      %p181 = pneg %p55
      %p182 = pneg %p84
      %p183 = pneg %p81
      %p184 = scmp.lt.s32.totalorder %s16, 1
      %s185 = scalar_select %p184, %s16, 1
      %s186 = smul.addr %s185, 4
      %s187 = smul.addr %s186, 4
      %s188 = scalar_lea.vmem %s2, %s187
      %p189 = pneg %p110
      %p190 = pneg %p107
      %p191 = scmp.lt.s32.totalorder %s16, 1
      %s192 = scalar_select %p191, %s16, 1
      %s193 = smul.addr %s192, 4
      %s194 = smul.addr %s193, 8
      %s195 = scalar_lea.vmem %s3, %s194
      %p196 = pneg %p136
      %p197 = pneg %p133
      %p198 = scmp.lt.s32.totalorder %s16, 1
      %s199 = scalar_select %p198, %s16, 1
      %s200 = smul.addr %s199, 4
      %s201 = smul.addr %s200, 8
      %s202 = scalar_lea.vmem %s4, %s201
      %p203 = scmp.lt.s32.totalorder %s16, 1
      %s204 = scalar_select %p203, %s16, 1
      %s205 = smul.addr %s204, 2
      %s206 = smul.addr %s205, 4
      %s207 = scalar_lea.vmem %s0, %s206
      %p208 = scmp.lt.s32.totalorder %s16, 1
      %s209 = scalar_select %p208, %s16, 1
      %s210 = smul.addr %s209, 4
      %s211 = smul.addr %s210, 4
      %s212 = scalar_lea.vmem %s2, %s211
      %p213 = scmp.lt.s32.totalorder %s16, 1
      %s214 = scalar_select %p213, %s16, 1
      %s215 = smul.addr %s214, 4
      %s216 = smul.addr %s215, 8
      %s217 = scalar_lea.vmem %s3, %s216
      %p218 = scmp.lt.s32.totalorder %s16, 1
      %s219 = scalar_select %p218, %s16, 1
      %s220 = smul.addr %s219, 4
      %s221 = smul.addr %s220, 8
      %s222 = scalar_lea.vmem %s4, %s221
      %v224 = vld [vmem:[%s1] sm:$0xf]
      %v225 = vld [vmem:[%s1 + $0x4] sm:$0xf]
      %v226 = vld [vmem:[%s1 + $0x8] sm:$0xf]
      %v227 = vld [vmem:[%s1 + $0xc] sm:$0xf]
      %v228 = vld [vmem:[%s1 + $0x10] sm:$0xf]
      %v229 = vld [vmem:[%s1 + $0x14] sm:$0xf]
      %v230 = vld [vmem:[%s1 + $0x18] sm:$0xf]
      %v231 = vld [vmem:[%s1 + $0x1c] sm:$0xf]
      %v232 = vld [vmem:[%s1 + $0x20] sm:$0xf]
      %v233 = vld [vmem:[%s1 + $0x24] sm:$0xf]
      %v234 = vld [vmem:[%s1 + $0x28] sm:$0xf]
      %v235 = vld [vmem:[%s1 + $0x2c] sm:$0xf]
      %v236 = vld [vmem:[%s207] sm:$0xf]
      %v237 = vld [vmem:[%s207 + $0x4] sm:$0xf]
      %v250 = vunpack.c.l.b16 %v224
      %v251 = vunpack.c.l.b16 %v225
      %v252 = vunpack.c.l.b16 %v226
      %v253 = vunpack.c.l.b16 %v227
      %v254 = vunpack.c.l.b16 %v228
      %v255 = vunpack.c.l.b16 %v229
      %v256 = vunpack.c.l.b16 %v230
      %v257 = vunpack.c.l.b16 %v231
      %v258 = vunpack.c.l.b16 %v232
      %v259 = vunpack.c.l.b16 %v233
      %v260 = vunpack.c.l.b16 %v234
      %v261 = vunpack.c.l.b16 %v235
      %v262 = vpack.c.b16 %v251, %v250
      %v263 = vpack.c.b16 %v253, %v252
      %v264 = vpack.c.b16 %v255, %v254
      %v265 = vpack.c.b16 %v257, %v256
      %v266 = vpack.c.b16 %v259, %v258
      %v267 = vpack.c.b16 %v261, %v260
      %v270 = vunpack.c.l.b16 %v236
      %v271 = vunpack.c.l.b16 %v237
      %v272 = vpack.c.b16 %v271, %v270
      %vm274 = vcmask 130048
      %v276 = vsel %vm274, %v262, 0
      %v279 = vsel %vm274, %v263, 0
      %v282 = vsel %vm274, %v264, 0
      %v285 = vsel %vm274, %v265, 0
      %v288 = vsel %vm274, %v266, 0
      %v291 = vsel %vm274, %v267, 0
      %293 = vmatprep.subr.bf16.mxu0 0
      %294 = vmatpush1.bf16.msra.mxu0 %v272
      %295 = vmatprep.subr.bf16.mxu0 0
      %296 = vmatpush1.bf16.msra.mxu0 0
      %297 = vmatprep.subr.bf16.mxu0 0
      %298 = vmatpush1.bf16.msra.mxu0 0
      %299 = vmatprep.subr.bf16.mxu0 0
      %300 = vmatpush1.bf16.msra.mxu0 0
      %301 = vmatprep.subr.bf16.mxu0 0
      %302 = vmatpush1.bf16.msra.mxu0 0
      %303 = vmatprep.subr.bf16.mxu0 0
      %304 = vmatpush1.bf16.msra.mxu0 0
      %305 = vmatprep.subr.bf16.mxu0 0
      %306 = vmatpush1.bf16.msra.mxu0 0
      %307 = vmatprep.subr.bf16.mxu0 0
      %308 = vmatpush1.bf16.msra.mxu0 0
      %309 = vmatprep.subr.bf16.mxu0 0
      %310 = vmatpush1.bf16.msra.mxu0 0
      %311 = vmatprep.subr.bf16.mxu0 0
      %312 = vmatpush1.bf16.msra.mxu0 0
      %313 = vmatprep.subr.bf16.mxu0 0
      %314 = vmatpush1.bf16.msra.mxu0 0
      %315 = vmatprep.subr.bf16.mxu0 0
      %316 = vmatpush1.bf16.msra.mxu0 0
      %317 = vmatprep.subr.bf16.mxu0 0
      %318 = vmatpush1.bf16.msra.mxu0 0
      %319 = vmatprep.subr.bf16.mxu0 0
      %320 = vmatpush1.bf16.msra.mxu0 0
      %321 = vmatprep.subr.bf16.mxu0 0
      %322 = vmatpush1.bf16.msra.mxu0 0
      %323 = vmatprep.subr.bf16.mxu0 0
      %324 = vmatpush1.bf16.msra.mxu0 0
      %325 = vmatprep.mubr.bf16.mxu0 0
      %326 = vmatmul.mubr.bf16.gmra.mrb[0].mxu0 %v276
      %v327 = vpop.f32.mrb[0].mxu0
      %v328 = vadd.f32 0.0, %v327
      %v329 = vpop.f32.mrb[0].mxu0
      %v330 = vpop.f32.mrb[0].mxu0
      %v331 = vadd.f32 0.0, %v330
      %v332 = vpop.f32.mrb[0].mxu0
      %333 = vmatprep.mubr.bf16.mxu0 0
      %334 = vmatmul.mubr.bf16.gmra.mrb[0].mxu0 %v279
      %v335 = vpop.f32.mrb[0].mxu0
      %v336 = vadd.f32 0.0, %v335
      %v337 = vpop.f32.mrb[0].mxu0
      %v338 = vpop.f32.mrb[0].mxu0
      %v339 = vadd.f32 0.0, %v338
      %v340 = vpop.f32.mrb[0].mxu0
      %341 = vmatprep.mubr.bf16.mxu0 0
      %342 = vmatmul.mubr.bf16.gmra.mrb[0].mxu0 %v282
      %v343 = vpop.f32.mrb[0].mxu0
      %v344 = vadd.f32 0.0, %v343
      %v345 = vpop.f32.mrb[0].mxu0
      %v346 = vpop.f32.mrb[0].mxu0
      %v347 = vadd.f32 0.0, %v346
      %v348 = vpop.f32.mrb[0].mxu0
      %349 = vmatprep.mubr.bf16.mxu0 0
      %350 = vmatmul.mubr.bf16.gmra.mrb[0].mxu0 %v285
      %v351 = vpop.f32.mrb[0].mxu0
      %v352 = vadd.f32 0.0, %v351
      %v353 = vpop.f32.mrb[0].mxu0
      %v354 = vpop.f32.mrb[0].mxu0
      %v355 = vadd.f32 0.0, %v354
      %v356 = vpop.f32.mrb[0].mxu0
      %357 = vmatprep.mubr.bf16.mxu0 0
      %358 = vmatmul.mubr.bf16.gmra.mrb[0].mxu0 %v288
      %v359 = vpop.f32.mrb[0].mxu0
      %v360 = vadd.f32 0.0, %v359
      %v361 = vpop.f32.mrb[0].mxu0
      %v362 = vpop.f32.mrb[0].mxu0
      %v363 = vadd.f32 0.0, %v362
      %v364 = vpop.f32.mrb[0].mxu0
      %365 = vmatprep.mubr.bf16.mxu0 0
      %366 = vmatmul.mubr.bf16.gmra.mrb[0].mxu0 %v291
      %v367 = vpop.f32.mrb[0].mxu0
      %v368 = vadd.f32 0.0, %v367
      %v369 = vpop.f32.mrb[0].mxu0
      %v370 = vpop.f32.mrb[0].mxu0
      %v371 = vadd.f32 0.0, %v370
      %v372 = vpop.f32.mrb[0].mxu0
      %373 = vdwg.mxu0
      %378 = vrot.lane.b32.xlu0 %v344, 127
      %v379 = vpop.permute.xlu0 %378
      %380 = vrot.lane.b32.xlu0 %v347, 127
      %v381 = vpop.permute.xlu0 %380
      %382 = vrot.lane.b32.xlu0 %v352, 127
      %v383 = vpop.permute.xlu0 %382
      %384 = vrot.lane.b32.xlu0 %v355, 127
      %v385 = vpop.permute.xlu0 %384
      %v390 = vadd.f32 %v328, %v379
      %v391 = vadd.f32 %v331, %v381
      %v392 = vadd.f32 %v336, %v383
      %v393 = vadd.f32 %v339, %v385
      %398 = vrot.lane.b32.xlu0 %v360, 126
      %v399 = vpop.permute.xlu0 %398
      %400 = vrot.lane.b32.xlu0 %v363, 126
      %v401 = vpop.permute.xlu0 %400
      %402 = vrot.lane.b32.xlu0 %v368, 126
      %v403 = vpop.permute.xlu0 %402
      %404 = vrot.lane.b32.xlu0 %v371, 126
      %v405 = vpop.permute.xlu0 %404
      %v410 = vadd.f32 %v390, %v399
      %v411 = vadd.f32 %v391, %v401
      %v412 = vadd.f32 %v392, %v403
      %v413 = vadd.f32 %v393, %v405
      %418 = vrot.lane.b32.xlu0 %v410, 1
      %v419 = vpop.permute.xlu0 %418
      %420 = vrot.lane.b32.xlu0 %v411, 1
      %v421 = vpop.permute.xlu0 %420
      %422 = vrot.lane.b32.xlu0 %v412, 1
      %v423 = vpop.permute.xlu0 %422
      %424 = vrot.lane.b32.xlu0 %v413, 1
      %v425 = vpop.permute.xlu0 %424
      %vm430 = vcmask 7168
      %v431 = vsel %vm430, 0.0, %v419
      %v432 = vsel %vm430, 0.0, %v421
      %v433 = vsel %vm430, 0.0, %v423
      %v434 = vsel %vm430, 0.0, %v425
      %vm435 = vcmask 138240
      %v436 = vsel %vm435, %v431, 0.0
      %v437 = vsel %vm435, %v432, 0.0
      %v438 = vsel %vm435, %v433, 0.0
      %v439 = vsel %vm435, %v434, 0.0
      %v440 = vpack.c.bf16 %v437, %v436
      %v441 = vpack.c.bf16 %v439, %v438
      %v444 = vunpack.c.l.b16 %v440
      %v445 = vunpack.c.h.b16 %v440
      %v446 = vunpack.c.l.b16 %v441
      %v447 = vunpack.c.h.b16 %v441
      %v448 = vpack.c.b16 %v444, %v444
      %v449 = vpack.c.b16 %v445, %v445
      %v450 = vpack.c.b16 %v446, %v446
      %v451 = vpack.c.b16 %v447, %v447
      %vm456 = vcmask 142336
      %457 = vst.msk [vmem:[%s212] sm:$0xf] %vm456, %v448
      %458 = vst.msk [vmem:[%s212 + $0x4] sm:$0xf] %vm456, %v449
      %459 = vst.msk [vmem:[%s212 + $0x8] sm:$0xf] %vm456, %v450
      %460 = vst.msk [vmem:[%s212 + $0xc] sm:$0xf] %vm456, %v451
      %v461 = vsel %vm274, %v410, 0.0
      %462 = vadd.xlane.f32.xlu0 %v461
      %v463 = vpop.xlane.xlu0 %462
      %v464 = vsel %vm274, %v411, 0.0
      %465 = vadd.xlane.f32.xlu0 %v464
      %v466 = vpop.xlane.xlu0 %465
      %v467 = vsel %vm274, %v412, 0.0
      %468 = vadd.xlane.f32.xlu0 %v467
      %v469 = vpop.xlane.xlu0 %468
      %v470 = vsel %vm274, %v413, 0.0
      %471 = vadd.xlane.f32.xlu0 %v470
      %v472 = vpop.xlane.xlu0 %471
      %473 = vst.msk [vmem:[%s217] sm:$0xff] %vm430, %v463
      %474 = vst.msk [vmem:[%s217 + $0x8] sm:$0xff] %vm430, %v466
      %475 = vst.msk [vmem:[%s217 + $0x10] sm:$0xff] %vm430, %v469
      %476 = vst.msk [vmem:[%s217 + $0x18] sm:$0xff] %vm430, %v472
      %v477 = vmul.f32 %v410, %v410
      %v478 = vmul.f32 %v411, %v411
      %v479 = vmul.f32 %v412, %v412
      %v480 = vmul.f32 %v413, %v413
      %v481 = vsel %vm274, %v477, 0.0
      %482 = vadd.xlane.f32.xlu0 %v481
      %v483 = vpop.xlane.xlu0 %482
      %v484 = vsel %vm274, %v478, 0.0
      %485 = vadd.xlane.f32.xlu0 %v484
      %v486 = vpop.xlane.xlu0 %485
      %v487 = vsel %vm274, %v479, 0.0
      %488 = vadd.xlane.f32.xlu0 %v487
      %v489 = vpop.xlane.xlu0 %488
      %v490 = vsel %vm274, %v480, 0.0
      %491 = vadd.xlane.f32.xlu0 %v490
      %v492 = vpop.xlane.xlu0 %491
      %493 = vst.msk [vmem:[%s222] sm:$0xff] %vm430, %v483
      %494 = vst.msk [vmem:[%s222 + $0x8] sm:$0xff] %vm430, %v486
      %495 = vst.msk [vmem:[%s222 + $0x10] sm:$0xff] %vm430, %v489
      %496 = vst.msk [vmem:[%s222 + $0x18] sm:$0xff] %vm430, %v492
      %p497 = scmp.lt.s32.totalorder %s16, 1
      %s498 = scalar_select %p497, %s16, 1
      %s499 = smul.addr %s498, 4
      %s500 = smul.addr %s499, 4
      %s501 = scalar_lea.vmem %s2, %s500
      %p502 = scmp.lt.s32.totalorder %s16, 1
      %s503 = scalar_select %p502, %s16, 1
      %s504 = smul.addr %s503, 4
      %s505 = smul.addr %s504, 8
      %s506 = scalar_lea.vmem %s3, %s505
      %p507 = scmp.lt.s32.totalorder %s16, 1
      %s508 = scalar_select %p507, %s16, 1
      %s509 = smul.addr %s508, 4
      %s510 = smul.addr %s509, 8
      %s511 = scalar_lea.vmem %s4, %s510
      // Predicated region
      $region29: #{my_residual_conv3d_forward.3} parent=27 // pred_check
        %p512 = pneg %p81
      $region30: #{my_residual_conv3d_forward.3} parent=27 // pred_check_branch
        %514 = sbr.rel (%p512) target = $region32
      $region31: #{my_residual_conv3d_forward.3} parent=27 // pred_region
        _
      $region32: #{my_residual_conv3d_forward.3} parent=27 // pred_fallthru
        _
      // Predicated region
      $region33: #{my_residual_conv3d_forward.3} parent=27 // pred_check
        %p515 = pneg %p107
      $region34: #{my_residual_conv3d_forward.3} parent=27 // pred_check_branch
        %517 = sbr.rel (%p515) target = $region36
      $region35: #{my_residual_conv3d_forward.3} parent=27 // pred_region
        _
      $region36: #{my_residual_conv3d_forward.3} parent=27 // pred_fallthru
        _
      // Predicated region
      $region37: #{my_residual_conv3d_forward.3} parent=27 // pred_check
        %p518 = pneg %p133
      $region38: #{my_residual_conv3d_forward.3} parent=27 // pred_check_branch
        %520 = sbr.rel (%p518) target = $region40
      $region39: #{my_residual_conv3d_forward.3} parent=27 // pred_region
        _
      $region40: #{my_residual_conv3d_forward.3} parent=27 // pred_fallthru
        _
    $region28: #{my_residual_conv3d_forward.3} parent=5 // pred_fallthru
      _
    %p521 = scmp.le.s32.totalorder 2, %s11
    // Predicated region
    $region41: #{my_residual_conv3d_forward.3} parent=5 // pred_check
      %p522 = pneg %p521
    $region42: #{my_residual_conv3d_forward.3} parent=5 // pred_check_branch
      %524 = sbr.rel (%p522) target = $region44
    $region43: #{my_residual_conv3d_forward.3} parent=5 // pred_region
      %s525 = ssub.s32 %s11, 2
      // Predicated region
      $region45: #{my_residual_conv3d_forward.3} parent=43 // pred_check
        %p526 = pneg %p87
      $region46: #{my_residual_conv3d_forward.3} parent=43 // pred_check_branch
        %528 = sbr.rel (%p526) target = $region48
      $region47: #{my_residual_conv3d_forward.3} parent=43 // pred_region
        %p529 = scmp.lt.s32.totalorder %s17, 1
        %s530 = scalar_select %p529, %s17, 1
        %s531 = smul.addr %s530, 4
        %s532 = smul.addr %s531, 4
        %s533 = scalar_lea.vmem %s2, %s532
      $region48: #{my_residual_conv3d_forward.3} parent=43 // pred_fallthru
        _
      // Predicated region
      $region49: #{my_residual_conv3d_forward.3} parent=43 // pred_check
        %p534 = pneg %p113
      $region50: #{my_residual_conv3d_forward.3} parent=43 // pred_check_branch
        %536 = sbr.rel (%p534) target = $region52
      $region51: #{my_residual_conv3d_forward.3} parent=43 // pred_region
        %p537 = scmp.lt.s32.totalorder %s17, 1
        %s538 = scalar_select %p537, %s17, 1
        %s539 = smul.addr %s538, 4
        %s540 = smul.addr %s539, 8
        %s541 = scalar_lea.vmem %s3, %s540
      $region52: #{my_residual_conv3d_forward.3} parent=43 // pred_fallthru
        _
      // Predicated region
      $region53: #{my_residual_conv3d_forward.3} parent=43 // pred_check
        %p542 = pneg %p139
      $region54: #{my_residual_conv3d_forward.3} parent=43 // pred_check_branch
        %544 = sbr.rel (%p542) target = $region56
      $region55: #{my_residual_conv3d_forward.3} parent=43 // pred_region
        %p545 = scmp.lt.s32.totalorder %s17, 1
        %s546 = scalar_select %p545, %s17, 1
        %s547 = smul.addr %s546, 4
        %s548 = smul.addr %s547, 8
        %s549 = scalar_lea.vmem %s4, %s548
      $region56: #{my_residual_conv3d_forward.3} parent=43 // pred_fallthru
        _
    $region44: #{my_residual_conv3d_forward.3} parent=5 // pred_fallthru
      _
  $region6: #{my_residual_conv3d_forward.3} parent=0 // loop_footer
    %s15 = sadd.s32 1, %s11
  $region7: #{my_residual_conv3d_forward.3} parent=0 // loop_footer_branch
    %10 = sbr.rel target = $region3
  $region8: #{my_residual_conv3d_forward.3} parent=0 // loop_exit
    _

// kernel: my_residual_conv3d_forward.4
$region0: #{my_residual_conv3d_forward.4}
  #allocation0 [shape = 'u32[]', space=smem, size = 0x4, offset = 0x4, fixed_abs, tag = 'smem constant byte address 0x4 - core index']
  #allocation1 [shape = 'u32[144,128]{1,0:T(1,128)}', space=vmem, size = 0x12000, scoped, tag = 'internal scratch']
  %s0 = inlined_call_operand.vmem [shape: bf16[2,32,18], index: 0, kind: input, shape index: {}]
  %s1 = inlined_call_operand.vmem [shape: bf16[96,32], index: 1, kind: input, shape index: {}]
  %s2 = inlined_call_operand.vmem [shape: f32[32,1], index: 2, kind: input, shape index: {}]
  %s3 = inlined_call_operand.vmem [shape: f32[32,1], index: 3, kind: input, shape index: {}]
  %s4 = inlined_call_operand.vmem [shape: bf16[2,32,18], index: 4, kind: output, shape index: {0}]
  %s5 = inlined_call_operand.vmem [shape: f32[2,32,1], index: 5, kind: output, shape index: {1}]
  %s6 = inlined_call_operand.vmem [shape: f32[2,32,1], index: 6, kind: output, shape index: {2}]
  %7 = xla_tuple %s4, %s5, %s6
  %s8 = sld [smem:[#allocation0]]
  $region65: #{my_residual_conv3d_forward.4} parent=0
    _
  %s10 = ssub.s32 1, %s8
  %s11 = scalar_select 0, %s10, %s8
  loop: start=0, step=1, limit=4
  $region2: #{my_residual_conv3d_forward.4} parent=0 // loop_pre_header
    _
  $region3: #{my_residual_conv3d_forward.4} parent=0 // loop_header
    %s13 = sphi 0, %s17
    %p14 = scmp.ge.s32.totalorder %s13, 4
    %s23 = sphi 0, %s25
    %s26 = sphi 0, %s23
    %s27 = sphi 0, %s26
    %s43 = sphi 0, %s27
    %s47 = sphi 0, %s47
    %s49 = sphi 0, %s47
    %s50 = sphi 0, %s49
    %s64 = sphi 0, %s50
    %s68 = sphi 0, %s68
    %s70 = sphi 0, %s68
    %s71 = sphi 0, %s70
    %s85 = sphi 0, %s71
    %s89 = sphi 0, %s89
    %s91 = sphi 0, %s89
    %s92 = sphi 0, %s91
    %s106 = sphi 0, %s92
    %s112 = sphi 0, %s114
    %s115 = sphi 0, %s112
    %s116 = sphi 0, %s115
    %s132 = sphi 0, %s116
    %s138 = sphi 0, %s140
    %s141 = sphi 0, %s138
    %s142 = sphi 0, %s141
    %s158 = sphi 0, %s142
    %s164 = sphi 0, %s166
    %s167 = sphi 0, %s164
    %s168 = sphi 0, %s167
    %s184 = sphi 0, %s168
  $region4: #{my_residual_conv3d_forward.4} parent=0 // loop_header_branch
    %16 = sbr.rel (%p14) target = $region8
  $region5: #{my_residual_conv3d_forward.4} parent=0 // loop_body
    %s18 = ssub.s32 %s13, 1
    %s19 = ssub.s32 %s13, 2
    %s20 = sadd.s32 %s13, 1
    %s21 = ssub.s32 %s13, %s20
    %p22 = scmp.eq.s32.totalorder %s21, 0
    %s24 = sadd.s32 %s23, 1
    %s25 = scalar_select %p22, %s23, %s24
    %p28 = pneg %p22
    %p29 = scmp.eq.s32.totalorder %s13, 1
    %p30 = por %p28, %p29
    %p31 = scmp.ne.s32.totalorder %s23, %s26
    %p32 = scmp.eq.s32.totalorder %s13, 0
    %p33 = por %p31, %p32
    %p34 = scmp.ne.s32.totalorder %s23, %s26
    %p35 = scmp.eq.s32.totalorder %s18, 1
    %p36 = por %p34, %p35
    %p37 = scmp.ne.s32.totalorder %s26, %s27
    %p38 = scmp.eq.s32.totalorder %s18, 0
    %p39 = por %p37, %p38
    %p40 = scmp.ne.s32.totalorder %s26, %s27
    %p41 = scmp.eq.s32.totalorder %s19, 1
    %p42 = por %p40, %p41
    %p44 = scmp.ne.s32.totalorder %s27, %s43
    %p45 = scmp.eq.s32.totalorder %s19, 0
    %p46 = por %p44, %p45
    %s48 = sadd.s32 %s47, 1
    %p51 = scmp.eq.s32.totalorder %s13, 1
    %p52 = scmp.ne.s32.totalorder %s47, %s49
    %p53 = scmp.eq.s32.totalorder %s13, 0
    %p54 = por %p52, %p53
    %p55 = scmp.ne.s32.totalorder %s47, %s49
    %p56 = scmp.eq.s32.totalorder %s18, 1
    %p57 = por %p55, %p56
    %p58 = scmp.ne.s32.totalorder %s49, %s50
    %p59 = scmp.eq.s32.totalorder %s18, 0
    %p60 = por %p58, %p59
    %p61 = scmp.ne.s32.totalorder %s49, %s50
    %p62 = scmp.eq.s32.totalorder %s19, 1
    %p63 = por %p61, %p62
    %p65 = scmp.ne.s32.totalorder %s50, %s64
    %p66 = scmp.eq.s32.totalorder %s19, 0
    %p67 = por %p65, %p66
    %s69 = sadd.s32 %s68, 1
    %p72 = scmp.eq.s32.totalorder %s13, 1
    %p73 = scmp.ne.s32.totalorder %s68, %s70
    %p74 = scmp.eq.s32.totalorder %s13, 0
    %p75 = por %p73, %p74
    %p76 = scmp.ne.s32.totalorder %s68, %s70
    %p77 = scmp.eq.s32.totalorder %s18, 1
    %p78 = por %p76, %p77
    %p79 = scmp.ne.s32.totalorder %s70, %s71
    %p80 = scmp.eq.s32.totalorder %s18, 0
    %p81 = por %p79, %p80
    %p82 = scmp.ne.s32.totalorder %s70, %s71
    %p83 = scmp.eq.s32.totalorder %s19, 1
    %p84 = por %p82, %p83
    %p86 = scmp.ne.s32.totalorder %s71, %s85
    %p87 = scmp.eq.s32.totalorder %s19, 0
    %p88 = por %p86, %p87
    %s90 = sadd.s32 %s89, 1
    %p93 = scmp.eq.s32.totalorder %s13, 1
    %p94 = scmp.ne.s32.totalorder %s89, %s91
    %p95 = scmp.eq.s32.totalorder %s13, 0
    %p96 = por %p94, %p95
    %p97 = scmp.ne.s32.totalorder %s89, %s91
    %p98 = scmp.eq.s32.totalorder %s18, 1
    %p99 = por %p97, %p98
    %p100 = scmp.ne.s32.totalorder %s91, %s92
    %p101 = scmp.eq.s32.totalorder %s18, 0
    %p102 = por %p100, %p101
    %p103 = scmp.ne.s32.totalorder %s91, %s92
    %p104 = scmp.eq.s32.totalorder %s19, 1
    %p105 = por %p103, %p104
    %p107 = scmp.ne.s32.totalorder %s92, %s106
    %p108 = scmp.eq.s32.totalorder %s19, 0
    %p109 = por %p107, %p108
    %s110 = ssub.s32 %s13, %s20
    %p111 = scmp.eq.s32.totalorder %s110, 0
    %s113 = sadd.s32 %s112, 1
    %s114 = scalar_select %p111, %s112, %s113
    %p117 = pneg %p111
    %p118 = scmp.eq.s32.totalorder %s13, 1
    %p119 = por %p117, %p118
    %p120 = scmp.ne.s32.totalorder %s112, %s115
    %p121 = scmp.eq.s32.totalorder %s13, 0
    %p122 = por %p120, %p121
    %p123 = scmp.ne.s32.totalorder %s112, %s115
    %p124 = scmp.eq.s32.totalorder %s18, 1
    %p125 = por %p123, %p124
    %p126 = scmp.ne.s32.totalorder %s115, %s116
    %p127 = scmp.eq.s32.totalorder %s18, 0
    %p128 = por %p126, %p127
    %p129 = scmp.ne.s32.totalorder %s115, %s116
    %p130 = scmp.eq.s32.totalorder %s19, 1
    %p131 = por %p129, %p130
    %p133 = scmp.ne.s32.totalorder %s116, %s132
    %p134 = scmp.eq.s32.totalorder %s19, 0
    %p135 = por %p133, %p134
    %s136 = ssub.s32 %s13, %s20
    %p137 = scmp.eq.s32.totalorder %s136, 0
    %s139 = sadd.s32 %s138, 1
    %s140 = scalar_select %p137, %s138, %s139
    %p143 = pneg %p137
    %p144 = scmp.eq.s32.totalorder %s13, 1
    %p145 = por %p143, %p144
    %p146 = scmp.ne.s32.totalorder %s138, %s141
    %p147 = scmp.eq.s32.totalorder %s13, 0
    %p148 = por %p146, %p147
    %p149 = scmp.ne.s32.totalorder %s138, %s141
    %p150 = scmp.eq.s32.totalorder %s18, 1
    %p151 = por %p149, %p150
    %p152 = scmp.ne.s32.totalorder %s141, %s142
    %p153 = scmp.eq.s32.totalorder %s18, 0
    %p154 = por %p152, %p153
    %p155 = scmp.ne.s32.totalorder %s141, %s142
    %p156 = scmp.eq.s32.totalorder %s19, 1
    %p157 = por %p155, %p156
    %p159 = scmp.ne.s32.totalorder %s142, %s158
    %p160 = scmp.eq.s32.totalorder %s19, 0
    %p161 = por %p159, %p160
    %s162 = ssub.s32 %s13, %s20
    %p163 = scmp.eq.s32.totalorder %s162, 0
    %s165 = sadd.s32 %s164, 1
    %s166 = scalar_select %p163, %s164, %s165
    %p169 = pneg %p163
    %p170 = scmp.eq.s32.totalorder %s13, 1
    %p171 = por %p169, %p170
    %p172 = scmp.ne.s32.totalorder %s164, %s167
    %p173 = scmp.eq.s32.totalorder %s13, 0
    %p174 = por %p172, %p173
    %p175 = scmp.ne.s32.totalorder %s164, %s167
    %p176 = scmp.eq.s32.totalorder %s18, 1
    %p177 = por %p175, %p176
    %p178 = scmp.ne.s32.totalorder %s167, %s168
    %p179 = scmp.eq.s32.totalorder %s18, 0
    %p180 = por %p178, %p179
    %p181 = scmp.ne.s32.totalorder %s167, %s168
    %p182 = scmp.eq.s32.totalorder %s19, 1
    %p183 = por %p181, %p182
    %p185 = scmp.ne.s32.totalorder %s168, %s184
    %p186 = scmp.eq.s32.totalorder %s19, 0
    %p187 = por %p185, %p186
    %p188 = scmp.le.s32.totalorder 1, %s13
    %p189 = scmp.lt.s32.totalorder %s13, 3
    %p190 = pnand %p188, %p189
    %p191 = pneg %p190
    // Predicated region
    $region9: #{my_residual_conv3d_forward.4} parent=5 // pred_check
      _
    $region10: #{my_residual_conv3d_forward.4} parent=5 // pred_check_branch
      %193 = sbr.rel (%p190) target = $region12
    $region11: #{my_residual_conv3d_forward.4} parent=5 // pred_region
      %s194 = ssub.s32 %s13, 1
      // Predicated region
      $region13: #{my_residual_conv3d_forward.4} parent=11 // pred_check
        %p195 = pneg %p60
      $region14: #{my_residual_conv3d_forward.4} parent=11 // pred_check_branch
        %197 = sbr.rel (%p195) target = $region16
      $region15: #{my_residual_conv3d_forward.4} parent=11 // pred_region
        _
      $region16: #{my_residual_conv3d_forward.4} parent=11 // pred_fallthru
        _
      // Predicated region
      $region17: #{my_residual_conv3d_forward.4} parent=11 // pred_check
        %p198 = pneg %p81
      $region18: #{my_residual_conv3d_forward.4} parent=11 // pred_check_branch
        %200 = sbr.rel (%p198) target = $region20
      $region19: #{my_residual_conv3d_forward.4} parent=11 // pred_region
        _
      $region20: #{my_residual_conv3d_forward.4} parent=11 // pred_fallthru
        _
      // Predicated region
      $region21: #{my_residual_conv3d_forward.4} parent=11 // pred_check
        %p201 = pneg %p102
      $region22: #{my_residual_conv3d_forward.4} parent=11 // pred_check_branch
        %203 = sbr.rel (%p201) target = $region24
      $region23: #{my_residual_conv3d_forward.4} parent=11 // pred_region
        _
      $region24: #{my_residual_conv3d_forward.4} parent=11 // pred_fallthru
        _
    $region12: #{my_residual_conv3d_forward.4} parent=5 // pred_fallthru
      _
    %p204 = scmp.lt.s32.totalorder %s13, 2
    // Predicated region
    $region25: #{my_residual_conv3d_forward.4} parent=5 // pred_check
      %p205 = pneg %p204
    $region26: #{my_residual_conv3d_forward.4} parent=5 // pred_check_branch
      %207 = sbr.rel (%p205) target = $region28
    $region27: #{my_residual_conv3d_forward.4} parent=5 // pred_region
      // Predicated region
      $region29: #{my_residual_conv3d_forward.4} parent=27 // pred_check
        %p208 = pneg %p33
      $region30: #{my_residual_conv3d_forward.4} parent=27 // pred_check_branch
        %210 = sbr.rel (%p208) target = $region32
      $region31: #{my_residual_conv3d_forward.4} parent=27 // pred_region
        %p211 = scmp.lt.s32.totalorder %s13, 1
        %s212 = scalar_select %p211, %s13, 1
        %s213 = smul.addr %s212, 4
        %s214 = smul.addr %s213, 4
        %s215 = scalar_lea.vmem %s0, %s214
      $region32: #{my_residual_conv3d_forward.4} parent=27 // pred_fallthru
        _
    $region28: #{my_residual_conv3d_forward.4} parent=5 // pred_fallthru
      _
    %p216 = scmp.le.s32.totalorder 1, %s13
    %p217 = scmp.lt.s32.totalorder %s13, 3
    %p218 = pnand %p216, %p217
    %p219 = pneg %p218
    // Predicated region
    $region33: #{my_residual_conv3d_forward.4} parent=5 // pred_check
      _
    $region34: #{my_residual_conv3d_forward.4} parent=5 // pred_check_branch
      %221 = sbr.rel (%p218) target = $region36
    $region35: #{my_residual_conv3d_forward.4} parent=5 // pred_region
      %s222 = ssub.s32 %s13, 1
      %p223 = scmp.lt.s32.totalorder %s18, 1
      %s224 = scalar_select %p223, %s18, 1
      %s225 = smul.addr %s224, 4
      %s226 = smul.addr %s225, 4
      %s227 = scalar_lea.vmem %s0, %s226
      %p228 = pneg %p39
      %p229 = pneg %p36
      %p230 = pneg %p60
      %p231 = pneg %p57
      %p232 = pneg %p81
      %p233 = pneg %p78
      %p234 = pneg %p102
      %p235 = pneg %p99
      %p236 = pneg %p128
      %p237 = pneg %p125
      %p238 = scmp.lt.s32.totalorder %s18, 1
      %s239 = scalar_select %p238, %s18, 1
      %s240 = smul.addr %s239, 4
      %s241 = smul.addr %s240, 4
      %s242 = scalar_lea.vmem %s4, %s241
      %p243 = pneg %p154
      %p244 = pneg %p151
      %p245 = scmp.lt.s32.totalorder %s18, 1
      %s246 = scalar_select %p245, %s18, 1
      %s247 = smul.addr %s246, 4
      %s248 = smul.addr %s247, 8
      %s249 = scalar_lea.vmem %s5, %s248
      %p250 = pneg %p180
      %p251 = pneg %p177
      %p252 = scmp.lt.s32.totalorder %s18, 1
      %s253 = scalar_select %p252, %s18, 1
      %s254 = smul.addr %s253, 4
      %s255 = smul.addr %s254, 8
      %s256 = scalar_lea.vmem %s6, %s255
      %p257 = scmp.lt.s32.totalorder %s18, 1
      %s258 = scalar_select %p257, %s18, 1
      %s259 = smul.addr %s258, 4
      %s260 = smul.addr %s259, 4
      %s261 = scalar_lea.vmem %s0, %s260
      %p262 = scmp.lt.s32.totalorder %s18, 1
      %s263 = scalar_select %p262, %s18, 1
      %s264 = smul.addr %s263, 4
      %s265 = smul.addr %s264, 4
      %s266 = scalar_lea.vmem %s4, %s265
      %p267 = scmp.lt.s32.totalorder %s18, 1
      %s268 = scalar_select %p267, %s18, 1
      %s269 = smul.addr %s268, 4
      %s270 = smul.addr %s269, 8
      %s271 = scalar_lea.vmem %s5, %s270
      %p272 = scmp.lt.s32.totalorder %s18, 1
      %s273 = scalar_select %p272, %s18, 1
      %s274 = smul.addr %s273, 4
      %s275 = smul.addr %s274, 8
      %s276 = scalar_lea.vmem %s6, %s275
      %v278 = vld [vmem:[%s261] sm:$0xf]
      %v279 = vld [vmem:[%s261 + $0x4] sm:$0xf]
      %v280 = vld [vmem:[%s261 + $0x8] sm:$0xf]
      %v281 = vld [vmem:[%s261 + $0xc] sm:$0xf]
      %v282 = vunpack.c.l.bf16 %v278
      %v283 = vunpack.c.l.bf16 %v279
      %v284 = vunpack.c.l.bf16 %v280
      %v285 = vunpack.c.l.bf16 %v281
      %v286 = vld [vmem:[%s2] sm:$0xff]
      %v287 = vld [vmem:[%s2 + $0x8] sm:$0xff]
      %v288 = vld [vmem:[%s2 + $0x10] sm:$0xff]
      %v289 = vld [vmem:[%s2 + $0x18] sm:$0xff]
      %291 = vset.pattern.permute.xlu0 0
      %292 = vperm.xlu0 %291, %v286
      %v293 = vpop.permute.xlu0 %292
      %296 = vset.pattern.permute.xlu0 0
      %297 = vperm.xlu0 %296, %v287
      %v298 = vpop.permute.xlu0 %297
      %301 = vset.pattern.permute.xlu0 0
      %302 = vperm.xlu0 %301, %v288
      %v303 = vpop.permute.xlu0 %302
      %306 = vset.pattern.permute.xlu0 0
      %307 = vperm.xlu0 %306, %v289
      %v308 = vpop.permute.xlu0 %307
      %v310 = vmul.f32 %v282, %v293
      %v311 = vmul.f32 %v283, %v298
      %v312 = vmul.f32 %v284, %v303
      %v313 = vmul.f32 %v285, %v308
      %v314 = vld [vmem:[%s3] sm:$0xff]
      %v315 = vld [vmem:[%s3 + $0x8] sm:$0xff]
      %v316 = vld [vmem:[%s3 + $0x10] sm:$0xff]
      %v317 = vld [vmem:[%s3 + $0x18] sm:$0xff]
      %319 = vset.pattern.permute.xlu0 0
      %320 = vperm.xlu0 %319, %v314
      %v321 = vpop.permute.xlu0 %320
      %324 = vset.pattern.permute.xlu0 0
      %325 = vperm.xlu0 %324, %v315
      %v326 = vpop.permute.xlu0 %325
      %329 = vset.pattern.permute.xlu0 0
      %330 = vperm.xlu0 %329, %v316
      %v331 = vpop.permute.xlu0 %330
      %334 = vset.pattern.permute.xlu0 0
      %335 = vperm.xlu0 %334, %v317
      %v336 = vpop.permute.xlu0 %335
      %v338 = vadd.f32 %v310, %v321
      %v339 = vadd.f32 %v311, %v326
      %v340 = vadd.f32 %v312, %v331
      %v341 = vadd.f32 %v313, %v336
      %v342 = vxor.u32 %v338, 2147483648
      %v343 = vxor.u32 %v339, 2147483648
      %v344 = vxor.u32 %v340, 2147483648
      %v345 = vxor.u32 %v341, 2147483648
      %v346 = vmul.f32 %v342, 1.442695
      %v347 = vpow.pop %v346
      %v348 = vmul.f32 %v343, 1.442695
      %v349 = vpow.pop %v348
      %v350 = vmul.f32 %v344, 1.442695
      %v351 = vpow.pop %v350
      %v352 = vmul.f32 %v345, 1.442695
      %v353 = vpow.pop %v352
      %v354 = vadd.f32 %v347, 1.0
      %v355 = vadd.f32 %v349, 1.0
      %v356 = vadd.f32 %v351, 1.0
      %v357 = vadd.f32 %v353, 1.0
      %v358 = vrcp.pop %v354
      %v359 = vmul.f32 1.0, %v358
      %v360 = vrcp.pop %v355
      %v361 = vmul.f32 1.0, %v360
      %v362 = vrcp.pop %v356
      %v363 = vmul.f32 1.0, %v362
      %v364 = vrcp.pop %v357
      %v365 = vmul.f32 1.0, %v364
      %v366 = vmul.f32 %v338, %v359
      %v367 = vmul.f32 %v339, %v361
      %v368 = vmul.f32 %v340, %v363
      %v369 = vmul.f32 %v341, %v365
      %v370 = vlaneseq
      %v371 = vand.u32 %v370, 127
      %vm372 = vcmp.ge.s32.totalorder %v371, 1
      %vm373 = vcmp.le.s32.totalorder %v371, 16
      %vm374 = vmand %vm372, %vm373
      %v375 = vsel %vm374, 1, 0
      %vm376 = vcmp.eq.s32.totalorder %v375, 1
      %v377 = vsel %vm376, %v366, 0.0
      %v378 = vsel %vm376, %v367, 0.0
      %v379 = vsel %vm376, %v368, 0.0
      %v380 = vsel %vm376, %v369, 0.0
      %v381 = vld [vmem:[%s1] sm:$0xf]
      %v382 = vld [vmem:[%s1 + $0x4] sm:$0xf]
      %v383 = vld [vmem:[%s1 + $0x8] sm:$0xf]
      %v384 = vld [vmem:[%s1 + $0xc] sm:$0xf]
      %v385 = vld [vmem:[%s1 + $0x10] sm:$0xf]
      %v386 = vld [vmem:[%s1 + $0x14] sm:$0xf]
      %v387 = vld [vmem:[%s1 + $0x18] sm:$0xf]
      %v388 = vld [vmem:[%s1 + $0x1c] sm:$0xf]
      %v389 = vld [vmem:[%s1 + $0x20] sm:$0xf]
      %v390 = vld [vmem:[%s1 + $0x24] sm:$0xf]
      %v391 = vld [vmem:[%s1 + $0x28] sm:$0xf]
      %v392 = vld [vmem:[%s1 + $0x2c] sm:$0xf]
      %v393 = vpack.c.bf16 %v378, %v377
      %v394 = vpack.c.bf16 %v380, %v379
      %v407 = vunpack.c.l.b16 %v381
      %v408 = vunpack.c.l.b16 %v382
      %v409 = vunpack.c.l.b16 %v383
      %v410 = vunpack.c.l.b16 %v384
      %v411 = vunpack.c.l.b16 %v385
      %v412 = vunpack.c.l.b16 %v386
      %v413 = vunpack.c.l.b16 %v387
      %v414 = vunpack.c.l.b16 %v388
      %v415 = vunpack.c.l.b16 %v389
      %v416 = vunpack.c.l.b16 %v390
      %v417 = vunpack.c.l.b16 %v391
      %v418 = vunpack.c.l.b16 %v392
      %v419 = vpack.c.b16 %v408, %v407
      %v420 = vpack.c.b16 %v410, %v409
      %v421 = vpack.c.b16 %v412, %v411
      %v422 = vpack.c.b16 %v414, %v413
      %v423 = vpack.c.b16 %v416, %v415
      %v424 = vpack.c.b16 %v418, %v417
      %vm425 = vcmask 261120
      %v427 = vsel %vm425, %v419, 0
      %v430 = vsel %vm425, %v420, 0
      %v433 = vsel %vm425, %v421, 0
      %v436 = vsel %vm425, %v422, 0
      %v439 = vsel %vm425, %v423, 0
      %v442 = vsel %vm425, %v424, 0
      %444 = vmatprep.subr.bf16.mxu0 0
      %445 = vmatpush1.bf16.msra.mxu0 %v393
      %446 = vmatprep.subr.bf16.mxu0 0
      %447 = vmatpush1.bf16.msra.mxu0 %v394
      %448 = vmatprep.subr.bf16.mxu0 0
      %449 = vmatpush1.bf16.msra.mxu0 0
      %450 = vmatprep.subr.bf16.mxu0 0
      %451 = vmatpush1.bf16.msra.mxu0 0
      %452 = vmatprep.subr.bf16.mxu0 0
      %453 = vmatpush1.bf16.msra.mxu0 0
      %454 = vmatprep.subr.bf16.mxu0 0
      %455 = vmatpush1.bf16.msra.mxu0 0
      %456 = vmatprep.subr.bf16.mxu0 0
      %457 = vmatpush1.bf16.msra.mxu0 0
      %458 = vmatprep.subr.bf16.mxu0 0
      %459 = vmatpush1.bf16.msra.mxu0 0
      %460 = vmatprep.subr.bf16.mxu0 0
      %461 = vmatpush1.bf16.msra.mxu0 0
      %462 = vmatprep.subr.bf16.mxu0 0
      %463 = vmatpush1.bf16.msra.mxu0 0
      %464 = vmatprep.subr.bf16.mxu0 0
      %465 = vmatpush1.bf16.msra.mxu0 0
      %466 = vmatprep.subr.bf16.mxu0 0
      %467 = vmatpush1.bf16.msra.mxu0 0
      %468 = vmatprep.subr.bf16.mxu0 0
      %469 = vmatpush1.bf16.msra.mxu0 0
      %470 = vmatprep.subr.bf16.mxu0 0
      %471 = vmatpush1.bf16.msra.mxu0 0
      %472 = vmatprep.subr.bf16.mxu0 0
      %473 = vmatpush1.bf16.msra.mxu0 0
      %474 = vmatprep.subr.bf16.mxu0 0
      %475 = vmatpush1.bf16.msra.mxu0 0
      %476 = vmatprep.mubr.bf16.mxu0 0
      %477 = vmatmul.mubr.bf16.gmra.mrb[0].mxu0 %v427
      %v478 = vpop.f32.mrb[0].mxu0
      %v479 = vadd.f32 0.0, %v478
      %v480 = vpop.f32.mrb[0].mxu0
      %v481 = vpop.f32.mrb[0].mxu0
      %v482 = vadd.f32 0.0, %v481
      %v483 = vpop.f32.mrb[0].mxu0
      %484 = vmatprep.mubr.bf16.mxu0 0
      %485 = vmatmul.mubr.bf16.gmra.mrb[0].mxu0 %v430
      %v486 = vpop.f32.mrb[0].mxu0
      %v487 = vadd.f32 0.0, %v486
      %v488 = vpop.f32.mrb[0].mxu0
      %v489 = vpop.f32.mrb[0].mxu0
      %v490 = vadd.f32 0.0, %v489
      %v491 = vpop.f32.mrb[0].mxu0
      %492 = vmatprep.mubr.bf16.mxu0 0
      %493 = vmatmul.mubr.bf16.gmra.mrb[0].mxu0 %v433
      %v494 = vpop.f32.mrb[0].mxu0
      %v495 = vadd.f32 0.0, %v494
      %v496 = vpop.f32.mrb[0].mxu0
      %v497 = vpop.f32.mrb[0].mxu0
      %v498 = vadd.f32 0.0, %v497
      %v499 = vpop.f32.mrb[0].mxu0
      %500 = vmatprep.mubr.bf16.mxu0 0
      %501 = vmatmul.mubr.bf16.gmra.mrb[0].mxu0 %v436
      %v502 = vpop.f32.mrb[0].mxu0
      %v503 = vadd.f32 0.0, %v502
      %v504 = vpop.f32.mrb[0].mxu0
      %v505 = vpop.f32.mrb[0].mxu0
      %v506 = vadd.f32 0.0, %v505
      %v507 = vpop.f32.mrb[0].mxu0
      %508 = vmatprep.mubr.bf16.mxu0 0
      %509 = vmatmul.mubr.bf16.gmra.mrb[0].mxu0 %v439
      %v510 = vpop.f32.mrb[0].mxu0
      %v511 = vadd.f32 0.0, %v510
      %v512 = vpop.f32.mrb[0].mxu0
      %v513 = vpop.f32.mrb[0].mxu0
      %v514 = vadd.f32 0.0, %v513
      %v515 = vpop.f32.mrb[0].mxu0
      %516 = vmatprep.mubr.bf16.mxu0 0
      %517 = vmatmul.mubr.bf16.gmra.mrb[0].mxu0 %v442
      %v518 = vpop.f32.mrb[0].mxu0
      %v519 = vadd.f32 0.0, %v518
      %v520 = vpop.f32.mrb[0].mxu0
      %v521 = vpop.f32.mrb[0].mxu0
      %v522 = vadd.f32 0.0, %v521
      %v523 = vpop.f32.mrb[0].mxu0
      %524 = vdwg.mxu0
      %529 = vrot.lane.b32.xlu0 %v495, 127
      %v530 = vpop.permute.xlu0 %529
      %531 = vrot.lane.b32.xlu0 %v498, 127
      %v532 = vpop.permute.xlu0 %531
      %533 = vrot.lane.b32.xlu0 %v503, 127
      %v534 = vpop.permute.xlu0 %533
      %535 = vrot.lane.b32.xlu0 %v506, 127
      %v536 = vpop.permute.xlu0 %535
      %v541 = vadd.f32 %v479, %v530
      %v542 = vadd.f32 %v482, %v532
      %v543 = vadd.f32 %v487, %v534
      %v544 = vadd.f32 %v490, %v536
      %549 = vrot.lane.b32.xlu0 %v511, 126
      %v550 = vpop.permute.xlu0 %549
      %551 = vrot.lane.b32.xlu0 %v514, 126
      %v552 = vpop.permute.xlu0 %551
      %553 = vrot.lane.b32.xlu0 %v519, 126
      %v554 = vpop.permute.xlu0 %553
      %555 = vrot.lane.b32.xlu0 %v522, 126
      %v556 = vpop.permute.xlu0 %555
      %v561 = vadd.f32 %v541, %v550
      %v562 = vadd.f32 %v542, %v552
      %v563 = vadd.f32 %v543, %v554
      %v564 = vadd.f32 %v544, %v556
      %569 = vrot.lane.b32.xlu0 %v561, 1
      %v570 = vpop.permute.xlu0 %569
      %571 = vrot.lane.b32.xlu0 %v562, 1
      %v572 = vpop.permute.xlu0 %571
      %573 = vrot.lane.b32.xlu0 %v563, 1
      %v574 = vpop.permute.xlu0 %573
      %575 = vrot.lane.b32.xlu0 %v564, 1
      %v576 = vpop.permute.xlu0 %575
      %vm581 = vcmask 7168
      %v582 = vsel %vm581, 0.0, %v570
      %v583 = vsel %vm581, 0.0, %v572
      %v584 = vsel %vm581, 0.0, %v574
      %v585 = vsel %vm581, 0.0, %v576
      %vm586 = vcmask 138240
      %v587 = vsel %vm586, %v582, 0.0
      %v588 = vsel %vm586, %v583, 0.0
      %v589 = vsel %vm586, %v584, 0.0
      %v590 = vsel %vm586, %v585, 0.0
      %v591 = vpack.c.bf16 %v588, %v587
      %v592 = vpack.c.bf16 %v590, %v589
      %v595 = vunpack.c.l.b16 %v591
      %v596 = vunpack.c.h.b16 %v591
      %v597 = vunpack.c.l.b16 %v592
      %v598 = vunpack.c.h.b16 %v592
      %v599 = vpack.c.b16 %v595, %v595
      %v600 = vpack.c.b16 %v596, %v596
      %v601 = vpack.c.b16 %v597, %v597
      %v602 = vpack.c.b16 %v598, %v598
      %vm607 = vcmask 142336
      %608 = vst.msk [vmem:[%s266] sm:$0xf] %vm607, %v599
      %609 = vst.msk [vmem:[%s266 + $0x4] sm:$0xf] %vm607, %v600
      %610 = vst.msk [vmem:[%s266 + $0x8] sm:$0xf] %vm607, %v601
      %611 = vst.msk [vmem:[%s266 + $0xc] sm:$0xf] %vm607, %v602
      %vm612 = vcmask 130048
      %v613 = vsel %vm612, %v561, 0.0
      %614 = vadd.xlane.f32.xlu0 %v613
      %v615 = vpop.xlane.xlu0 %614
      %v616 = vsel %vm612, %v562, 0.0
      %617 = vadd.xlane.f32.xlu0 %v616
      %v618 = vpop.xlane.xlu0 %617
      %v619 = vsel %vm612, %v563, 0.0
      %620 = vadd.xlane.f32.xlu0 %v619
      %v621 = vpop.xlane.xlu0 %620
      %v622 = vsel %vm612, %v564, 0.0
      %623 = vadd.xlane.f32.xlu0 %v622
      %v624 = vpop.xlane.xlu0 %623
      %625 = vst.msk [vmem:[%s271] sm:$0xff] %vm581, %v615
      %626 = vst.msk [vmem:[%s271 + $0x8] sm:$0xff] %vm581, %v618
      %627 = vst.msk [vmem:[%s271 + $0x10] sm:$0xff] %vm581, %v621
      %628 = vst.msk [vmem:[%s271 + $0x18] sm:$0xff] %vm581, %v624
      %v629 = vmul.f32 %v561, %v561
      %v630 = vmul.f32 %v562, %v562
      %v631 = vmul.f32 %v563, %v563
      %v632 = vmul.f32 %v564, %v564
      %v633 = vsel %vm612, %v629, 0.0
      %634 = vadd.xlane.f32.xlu0 %v633
      %v635 = vpop.xlane.xlu0 %634
      %v636 = vsel %vm612, %v630, 0.0
      %637 = vadd.xlane.f32.xlu0 %v636
      %v638 = vpop.xlane.xlu0 %637
      %v639 = vsel %vm612, %v631, 0.0
      %640 = vadd.xlane.f32.xlu0 %v639
      %v641 = vpop.xlane.xlu0 %640
      %v642 = vsel %vm612, %v632, 0.0
      %643 = vadd.xlane.f32.xlu0 %v642
      %v644 = vpop.xlane.xlu0 %643
      %645 = vst.msk [vmem:[%s276] sm:$0xff] %vm581, %v635
      %646 = vst.msk [vmem:[%s276 + $0x8] sm:$0xff] %vm581, %v638
      %647 = vst.msk [vmem:[%s276 + $0x10] sm:$0xff] %vm581, %v641
      %648 = vst.msk [vmem:[%s276 + $0x18] sm:$0xff] %vm581, %v644
      %p649 = scmp.lt.s32.totalorder %s18, 1
      %s650 = scalar_select %p649, %s18, 1
      %s651 = smul.addr %s650, 4
      %s652 = smul.addr %s651, 4
      %s653 = scalar_lea.vmem %s4, %s652
      %p654 = scmp.lt.s32.totalorder %s18, 1
      %s655 = scalar_select %p654, %s18, 1
      %s656 = smul.addr %s655, 4
      %s657 = smul.addr %s656, 8
      %s658 = scalar_lea.vmem %s5, %s657
      %p659 = scmp.lt.s32.totalorder %s18, 1
      %s660 = scalar_select %p659, %s18, 1
      %s661 = smul.addr %s660, 4
      %s662 = smul.addr %s661, 8
      %s663 = scalar_lea.vmem %s6, %s662
      // Predicated region
      $region37: #{my_residual_conv3d_forward.4} parent=35 // pred_check
        %p664 = pneg %p125
      $region38: #{my_residual_conv3d_forward.4} parent=35 // pred_check_branch
        %666 = sbr.rel (%p664) target = $region40
      $region39: #{my_residual_conv3d_forward.4} parent=35 // pred_region
        _
      $region40: #{my_residual_conv3d_forward.4} parent=35 // pred_fallthru
        _
      // Predicated region
      $region41: #{my_residual_conv3d_forward.4} parent=35 // pred_check
        %p667 = pneg %p151
      $region42: #{my_residual_conv3d_forward.4} parent=35 // pred_check_branch
        %669 = sbr.rel (%p667) target = $region44
      $region43: #{my_residual_conv3d_forward.4} parent=35 // pred_region
        _
      $region44: #{my_residual_conv3d_forward.4} parent=35 // pred_fallthru
        _
      // Predicated region
      $region45: #{my_residual_conv3d_forward.4} parent=35 // pred_check
        %p670 = pneg %p177
      $region46: #{my_residual_conv3d_forward.4} parent=35 // pred_check_branch
        %672 = sbr.rel (%p670) target = $region48
      $region47: #{my_residual_conv3d_forward.4} parent=35 // pred_region
        _
      $region48: #{my_residual_conv3d_forward.4} parent=35 // pred_fallthru
        _
    $region36: #{my_residual_conv3d_forward.4} parent=5 // pred_fallthru
      _
    %p673 = scmp.le.s32.totalorder 2, %s13
    // Predicated region
    $region49: #{my_residual_conv3d_forward.4} parent=5 // pred_check
      %p674 = pneg %p673
    $region50: #{my_residual_conv3d_forward.4} parent=5 // pred_check_branch
      %676 = sbr.rel (%p674) target = $region52
    $region51: #{my_residual_conv3d_forward.4} parent=5 // pred_region
      %s677 = ssub.s32 %s13, 2
      // Predicated region
      $region53: #{my_residual_conv3d_forward.4} parent=51 // pred_check
        %p678 = pneg %p131
      $region54: #{my_residual_conv3d_forward.4} parent=51 // pred_check_branch
        %680 = sbr.rel (%p678) target = $region56
      $region55: #{my_residual_conv3d_forward.4} parent=51 // pred_region
        %p681 = scmp.lt.s32.totalorder %s19, 1
        %s682 = scalar_select %p681, %s19, 1
        %s683 = smul.addr %s682, 4
        %s684 = smul.addr %s683, 4
        %s685 = scalar_lea.vmem %s4, %s684
      $region56: #{my_residual_conv3d_forward.4} parent=51 // pred_fallthru
        _
      // Predicated region
      $region57: #{my_residual_conv3d_forward.4} parent=51 // pred_check
        %p686 = pneg %p157
      $region58: #{my_residual_conv3d_forward.4} parent=51 // pred_check_branch
        %688 = sbr.rel (%p686) target = $region60
      $region59: #{my_residual_conv3d_forward.4} parent=51 // pred_region
        %p689 = scmp.lt.s32.totalorder %s19, 1
        %s690 = scalar_select %p689, %s19, 1
        %s691 = smul.addr %s690, 4
        %s692 = smul.addr %s691, 8
        %s693 = scalar_lea.vmem %s5, %s692
      $region60: #{my_residual_conv3d_forward.4} parent=51 // pred_fallthru
        _
      // Predicated region
      $region61: #{my_residual_conv3d_forward.4} parent=51 // pred_check
        %p694 = pneg %p183
      $region62: #{my_residual_conv3d_forward.4} parent=51 // pred_check_branch
        %696 = sbr.rel (%p694) target = $region64
      $region63: #{my_residual_conv3d_forward.4} parent=51 // pred_region
        %p697 = scmp.lt.s32.totalorder %s19, 1
        %s698 = scalar_select %p697, %s19, 1
        %s699 = smul.addr %s698, 4
        %s700 = smul.addr %s699, 8
        %s701 = scalar_lea.vmem %s6, %s700
      $region64: #{my_residual_conv3d_forward.4} parent=51 // pred_fallthru
        _
    $region52: #{my_residual_conv3d_forward.4} parent=5 // pred_fallthru
      _
  $region6: #{my_residual_conv3d_forward.4} parent=0 // loop_footer
    %s17 = sadd.s32 1, %s13
  $region7: #{my_residual_conv3d_forward.4} parent=0 // loop_footer_branch
    %12 = sbr.rel target = $region3
  $region8: #{my_residual_conv3d_forward.4} parent=0 // loop_exit
    _

// kernel: my_residual_conv3d_forward.5
$region0: #{my_residual_conv3d_forward.5}
  #allocation0 [shape = 'u32[]', space=smem, size = 0x4, offset = 0x4, fixed_abs, tag = 'smem constant byte address 0x4 - core index']
  #allocation1 [shape = 'u32[144,128]{1,0:T(1,128)}', space=vmem, size = 0x12000, scoped, tag = 'internal scratch']
  %s0 = inlined_call_operand.vmem [shape: bf16[2,32,18], index: 0, kind: input, shape index: {}]
  %s1 = inlined_call_operand.vmem [shape: bf16[2,4,18], index: 1, kind: input, shape index: {}]
  %s2 = inlined_call_operand.vmem [shape: bf16[32,4], index: 2, kind: input, shape index: {}]
  %s3 = inlined_call_operand.vmem [shape: f32[32,1], index: 3, kind: input, shape index: {}]
  %s4 = inlined_call_operand.vmem [shape: f32[32,1], index: 4, kind: input, shape index: {}]
  %s5 = inlined_call_operand.vmem [shape: f32[2,32,18], index: 5, kind: output, shape index: {}]
  %s6 = sld [smem:[#allocation0]]
  $region53: #{my_residual_conv3d_forward.5} parent=0
    _
  %s8 = ssub.s32 1, %s6
  %s9 = scalar_select 0, %s8, %s6
  loop: start=0, step=1, limit=4
  $region2: #{my_residual_conv3d_forward.5} parent=0 // loop_pre_header
    _
  $region3: #{my_residual_conv3d_forward.5} parent=0 // loop_header
    %s11 = sphi 0, %s15
    %p12 = scmp.ge.s32.totalorder %s11, 4
    %s21 = sphi 0, %s23
    %s24 = sphi 0, %s21
    %s25 = sphi 0, %s24
    %s41 = sphi 0, %s25
    %s47 = sphi 0, %s49
    %s50 = sphi 0, %s47
    %s51 = sphi 0, %s50
    %s67 = sphi 0, %s51
    %s71 = sphi 0, %s71
    %s73 = sphi 0, %s71
    %s74 = sphi 0, %s73
    %s88 = sphi 0, %s74
    %s92 = sphi 0, %s92
    %s94 = sphi 0, %s92
    %s95 = sphi 0, %s94
    %s109 = sphi 0, %s95
    %s113 = sphi 0, %s113
    %s115 = sphi 0, %s113
    %s116 = sphi 0, %s115
    %s130 = sphi 0, %s116
    %s136 = sphi 0, %s138
    %s139 = sphi 0, %s136
    %s140 = sphi 0, %s139
    %s156 = sphi 0, %s140
  $region4: #{my_residual_conv3d_forward.5} parent=0 // loop_header_branch
    %14 = sbr.rel (%p12) target = $region8
  $region5: #{my_residual_conv3d_forward.5} parent=0 // loop_body
    %s16 = ssub.s32 %s11, 1
    %s17 = ssub.s32 %s11, 2
    %s18 = sadd.s32 %s11, 1
    %s19 = ssub.s32 %s11, %s18
    %p20 = scmp.eq.s32.totalorder %s19, 0
    %s22 = sadd.s32 %s21, 1
    %s23 = scalar_select %p20, %s21, %s22
    %p26 = pneg %p20
    %p27 = scmp.eq.s32.totalorder %s11, 1
    %p28 = por %p26, %p27
    %p29 = scmp.ne.s32.totalorder %s21, %s24
    %p30 = scmp.eq.s32.totalorder %s11, 0
    %p31 = por %p29, %p30
    %p32 = scmp.ne.s32.totalorder %s21, %s24
    %p33 = scmp.eq.s32.totalorder %s16, 1
    %p34 = por %p32, %p33
    %p35 = scmp.ne.s32.totalorder %s24, %s25
    %p36 = scmp.eq.s32.totalorder %s16, 0
    %p37 = por %p35, %p36
    %p38 = scmp.ne.s32.totalorder %s24, %s25
    %p39 = scmp.eq.s32.totalorder %s17, 1
    %p40 = por %p38, %p39
    %p42 = scmp.ne.s32.totalorder %s25, %s41
    %p43 = scmp.eq.s32.totalorder %s17, 0
    %p44 = por %p42, %p43
    %s45 = ssub.s32 %s11, %s18
    %p46 = scmp.eq.s32.totalorder %s45, 0
    %s48 = sadd.s32 %s47, 1
    %s49 = scalar_select %p46, %s47, %s48
    %p52 = pneg %p46
    %p53 = scmp.eq.s32.totalorder %s11, 1
    %p54 = por %p52, %p53
    %p55 = scmp.ne.s32.totalorder %s47, %s50
    %p56 = scmp.eq.s32.totalorder %s11, 0
    %p57 = por %p55, %p56
    %p58 = scmp.ne.s32.totalorder %s47, %s50
    %p59 = scmp.eq.s32.totalorder %s16, 1
    %p60 = por %p58, %p59
    %p61 = scmp.ne.s32.totalorder %s50, %s51
    %p62 = scmp.eq.s32.totalorder %s16, 0
    %p63 = por %p61, %p62
    %p64 = scmp.ne.s32.totalorder %s50, %s51
    %p65 = scmp.eq.s32.totalorder %s17, 1
    %p66 = por %p64, %p65
    %p68 = scmp.ne.s32.totalorder %s51, %s67
    %p69 = scmp.eq.s32.totalorder %s17, 0
    %p70 = por %p68, %p69
    %s72 = sadd.s32 %s71, 1
    %p75 = scmp.eq.s32.totalorder %s11, 1
    %p76 = scmp.ne.s32.totalorder %s71, %s73
    %p77 = scmp.eq.s32.totalorder %s11, 0
    %p78 = por %p76, %p77
    %p79 = scmp.ne.s32.totalorder %s71, %s73
    %p80 = scmp.eq.s32.totalorder %s16, 1
    %p81 = por %p79, %p80
    %p82 = scmp.ne.s32.totalorder %s73, %s74
    %p83 = scmp.eq.s32.totalorder %s16, 0
    %p84 = por %p82, %p83
    %p85 = scmp.ne.s32.totalorder %s73, %s74
    %p86 = scmp.eq.s32.totalorder %s17, 1
    %p87 = por %p85, %p86
    %p89 = scmp.ne.s32.totalorder %s74, %s88
    %p90 = scmp.eq.s32.totalorder %s17, 0
    %p91 = por %p89, %p90
    %s93 = sadd.s32 %s92, 1
    %p96 = scmp.eq.s32.totalorder %s11, 1
    %p97 = scmp.ne.s32.totalorder %s92, %s94
    %p98 = scmp.eq.s32.totalorder %s11, 0
    %p99 = por %p97, %p98
    %p100 = scmp.ne.s32.totalorder %s92, %s94
    %p101 = scmp.eq.s32.totalorder %s16, 1
    %p102 = por %p100, %p101
    %p103 = scmp.ne.s32.totalorder %s94, %s95
    %p104 = scmp.eq.s32.totalorder %s16, 0
    %p105 = por %p103, %p104
    %p106 = scmp.ne.s32.totalorder %s94, %s95
    %p107 = scmp.eq.s32.totalorder %s17, 1
    %p108 = por %p106, %p107
    %p110 = scmp.ne.s32.totalorder %s95, %s109
    %p111 = scmp.eq.s32.totalorder %s17, 0
    %p112 = por %p110, %p111
    %s114 = sadd.s32 %s113, 1
    %p117 = scmp.eq.s32.totalorder %s11, 1
    %p118 = scmp.ne.s32.totalorder %s113, %s115
    %p119 = scmp.eq.s32.totalorder %s11, 0
    %p120 = por %p118, %p119
    %p121 = scmp.ne.s32.totalorder %s113, %s115
    %p122 = scmp.eq.s32.totalorder %s16, 1
    %p123 = por %p121, %p122
    %p124 = scmp.ne.s32.totalorder %s115, %s116
    %p125 = scmp.eq.s32.totalorder %s16, 0
    %p126 = por %p124, %p125
    %p127 = scmp.ne.s32.totalorder %s115, %s116
    %p128 = scmp.eq.s32.totalorder %s17, 1
    %p129 = por %p127, %p128
    %p131 = scmp.ne.s32.totalorder %s116, %s130
    %p132 = scmp.eq.s32.totalorder %s17, 0
    %p133 = por %p131, %p132
    %s134 = ssub.s32 %s11, %s18
    %p135 = scmp.eq.s32.totalorder %s134, 0
    %s137 = sadd.s32 %s136, 1
    %s138 = scalar_select %p135, %s136, %s137
    %p141 = pneg %p135
    %p142 = scmp.eq.s32.totalorder %s11, 1
    %p143 = por %p141, %p142
    %p144 = scmp.ne.s32.totalorder %s136, %s139
    %p145 = scmp.eq.s32.totalorder %s11, 0
    %p146 = por %p144, %p145
    %p147 = scmp.ne.s32.totalorder %s136, %s139
    %p148 = scmp.eq.s32.totalorder %s16, 1
    %p149 = por %p147, %p148
    %p150 = scmp.ne.s32.totalorder %s139, %s140
    %p151 = scmp.eq.s32.totalorder %s16, 0
    %p152 = por %p150, %p151
    %p153 = scmp.ne.s32.totalorder %s139, %s140
    %p154 = scmp.eq.s32.totalorder %s17, 1
    %p155 = por %p153, %p154
    %p157 = scmp.ne.s32.totalorder %s140, %s156
    %p158 = scmp.eq.s32.totalorder %s17, 0
    %p159 = por %p157, %p158
    %p160 = scmp.le.s32.totalorder 1, %s11
    %p161 = scmp.lt.s32.totalorder %s11, 3
    %p162 = pnand %p160, %p161
    %p163 = pneg %p162
    // Predicated region
    $region9: #{my_residual_conv3d_forward.5} parent=5 // pred_check
      _
    $region10: #{my_residual_conv3d_forward.5} parent=5 // pred_check_branch
      %165 = sbr.rel (%p162) target = $region12
    $region11: #{my_residual_conv3d_forward.5} parent=5 // pred_region
      %s166 = ssub.s32 %s11, 1
      // Predicated region
      $region13: #{my_residual_conv3d_forward.5} parent=11 // pred_check
        %p167 = pneg %p84
      $region14: #{my_residual_conv3d_forward.5} parent=11 // pred_check_branch
        %169 = sbr.rel (%p167) target = $region16
      $region15: #{my_residual_conv3d_forward.5} parent=11 // pred_region
        _
      $region16: #{my_residual_conv3d_forward.5} parent=11 // pred_fallthru
        _
      // Predicated region
      $region17: #{my_residual_conv3d_forward.5} parent=11 // pred_check
        %p170 = pneg %p105
      $region18: #{my_residual_conv3d_forward.5} parent=11 // pred_check_branch
        %172 = sbr.rel (%p170) target = $region20
      $region19: #{my_residual_conv3d_forward.5} parent=11 // pred_region
        _
      $region20: #{my_residual_conv3d_forward.5} parent=11 // pred_fallthru
        _
      // Predicated region
      $region21: #{my_residual_conv3d_forward.5} parent=11 // pred_check
        %p173 = pneg %p126
      $region22: #{my_residual_conv3d_forward.5} parent=11 // pred_check_branch
        %175 = sbr.rel (%p173) target = $region24
      $region23: #{my_residual_conv3d_forward.5} parent=11 // pred_region
        _
      $region24: #{my_residual_conv3d_forward.5} parent=11 // pred_fallthru
        _
    $region12: #{my_residual_conv3d_forward.5} parent=5 // pred_fallthru
      _
    %p176 = scmp.lt.s32.totalorder %s11, 2
    // Predicated region
    $region25: #{my_residual_conv3d_forward.5} parent=5 // pred_check
      %p177 = pneg %p176
    $region26: #{my_residual_conv3d_forward.5} parent=5 // pred_check_branch
      %179 = sbr.rel (%p177) target = $region28
    $region27: #{my_residual_conv3d_forward.5} parent=5 // pred_region
      // Predicated region
      $region29: #{my_residual_conv3d_forward.5} parent=27 // pred_check
        %p180 = pneg %p31
      $region30: #{my_residual_conv3d_forward.5} parent=27 // pred_check_branch
        %182 = sbr.rel (%p180) target = $region32
      $region31: #{my_residual_conv3d_forward.5} parent=27 // pred_region
        %p183 = scmp.lt.s32.totalorder %s11, 1
        %s184 = scalar_select %p183, %s11, 1
        %s185 = smul.addr %s184, 4
        %s186 = smul.addr %s185, 4
        %s187 = scalar_lea.vmem %s0, %s186
      $region32: #{my_residual_conv3d_forward.5} parent=27 // pred_fallthru
        _
      // Predicated region
      $region33: #{my_residual_conv3d_forward.5} parent=27 // pred_check
        %p188 = pneg %p57
      $region34: #{my_residual_conv3d_forward.5} parent=27 // pred_check_branch
        %190 = sbr.rel (%p188) target = $region36
      $region35: #{my_residual_conv3d_forward.5} parent=27 // pred_region
        %p191 = scmp.lt.s32.totalorder %s11, 1
        %s192 = scalar_select %p191, %s11, 1
        %s193 = smul.addr %s192, 2
        %s194 = scalar_lea.vmem %s1, %s193
      $region36: #{my_residual_conv3d_forward.5} parent=27 // pred_fallthru
        _
    $region28: #{my_residual_conv3d_forward.5} parent=5 // pred_fallthru
      _
    %p195 = scmp.le.s32.totalorder 1, %s11
    %p196 = scmp.lt.s32.totalorder %s11, 3
    %p197 = pnand %p195, %p196
    %p198 = pneg %p197
    // Predicated region
    $region37: #{my_residual_conv3d_forward.5} parent=5 // pred_check
      _
    $region38: #{my_residual_conv3d_forward.5} parent=5 // pred_check_branch
      %200 = sbr.rel (%p197) target = $region40
    $region39: #{my_residual_conv3d_forward.5} parent=5 // pred_region
      %s201 = ssub.s32 %s11, 1
      %p202 = scmp.lt.s32.totalorder %s16, 1
      %s203 = scalar_select %p202, %s16, 1
      %s204 = smul.addr %s203, 4
      %s205 = smul.addr %s204, 4
      %s206 = scalar_lea.vmem %s0, %s205
      %p207 = pneg %p37
      %p208 = pneg %p34
      %p209 = scmp.lt.s32.totalorder %s16, 1
      %s210 = scalar_select %p209, %s16, 1
      %s211 = smul.addr %s210, 2
      %s212 = scalar_lea.vmem %s1, %s211
      %p213 = pneg %p63
      %p214 = pneg %p60
      %p215 = pneg %p84
      %p216 = pneg %p81
      %p217 = pneg %p105
      %p218 = pneg %p102
      %p219 = pneg %p126
      %p220 = pneg %p123
      %p221 = pneg %p152
      %p222 = pneg %p149
      %p223 = scmp.lt.s32.totalorder %s16, 1
      %s224 = scalar_select %p223, %s16, 1
      %s225 = smul.addr %s224, 4
      %s226 = smul.addr %s225, 8
      %s227 = scalar_lea.vmem %s5, %s226
      %p228 = scmp.lt.s32.totalorder %s16, 1
      %s229 = scalar_select %p228, %s16, 1
      %s230 = smul.addr %s229, 4
      %s231 = smul.addr %s230, 4
      %s232 = scalar_lea.vmem %s0, %s231
      %p233 = scmp.lt.s32.totalorder %s16, 1
      %s234 = scalar_select %p233, %s16, 1
      %s235 = smul.addr %s234, 2
      %s236 = scalar_lea.vmem %s1, %s235
      %p237 = scmp.lt.s32.totalorder %s16, 1
      %s238 = scalar_select %p237, %s16, 1
      %s239 = smul.addr %s238, 4
      %s240 = smul.addr %s239, 8
      %s241 = scalar_lea.vmem %s5, %s240
      %v243 = vld [vmem:[%s232] sm:$0xf]
      %v244 = vld [vmem:[%s232 + $0x4] sm:$0xf]
      %v245 = vld [vmem:[%s232 + $0x8] sm:$0xf]
      %v246 = vld [vmem:[%s232 + $0xc] sm:$0xf]
      %v247 = vunpack.c.l.bf16 %v243
      %v248 = vunpack.c.l.bf16 %v244
      %v249 = vunpack.c.l.bf16 %v245
      %v250 = vunpack.c.l.bf16 %v246
      %v251 = vld [vmem:[%s3] sm:$0xff]
      %v252 = vld [vmem:[%s3 + $0x8] sm:$0xff]
      %v253 = vld [vmem:[%s3 + $0x10] sm:$0xff]
      %v254 = vld [vmem:[%s3 + $0x18] sm:$0xff]
      %256 = vset.pattern.permute.xlu0 0
      %257 = vperm.xlu0 %256, %v251
      %v258 = vpop.permute.xlu0 %257
      %261 = vset.pattern.permute.xlu0 0
      %262 = vperm.xlu0 %261, %v252
      %v263 = vpop.permute.xlu0 %262
      %266 = vset.pattern.permute.xlu0 0
      %267 = vperm.xlu0 %266, %v253
      %v268 = vpop.permute.xlu0 %267
      %271 = vset.pattern.permute.xlu0 0
      %272 = vperm.xlu0 %271, %v254
      %v273 = vpop.permute.xlu0 %272
      %v275 = vmul.f32 %v247, %v258
      %v276 = vmul.f32 %v248, %v263
      %v277 = vmul.f32 %v249, %v268
      %v278 = vmul.f32 %v250, %v273
      %v279 = vld [vmem:[%s4] sm:$0xff]
      %v280 = vld [vmem:[%s4 + $0x8] sm:$0xff]
      %v281 = vld [vmem:[%s4 + $0x10] sm:$0xff]
      %v282 = vld [vmem:[%s4 + $0x18] sm:$0xff]
      %284 = vset.pattern.permute.xlu0 0
      %285 = vperm.xlu0 %284, %v279
      %v286 = vpop.permute.xlu0 %285
      %289 = vset.pattern.permute.xlu0 0
      %290 = vperm.xlu0 %289, %v280
      %v291 = vpop.permute.xlu0 %290
      %294 = vset.pattern.permute.xlu0 0
      %295 = vperm.xlu0 %294, %v281
      %v296 = vpop.permute.xlu0 %295
      %299 = vset.pattern.permute.xlu0 0
      %300 = vperm.xlu0 %299, %v282
      %v301 = vpop.permute.xlu0 %300
      %v303 = vadd.f32 %v275, %v286
      %v304 = vadd.f32 %v276, %v291
      %v305 = vadd.f32 %v277, %v296
      %v306 = vadd.f32 %v278, %v301
      %v307 = vld [vmem:[%s2] sm:$0xf]
      %v308 = vld [vmem:[%s2 + $0x4] sm:$0xf]
      %v309 = vld [vmem:[%s2 + $0x8] sm:$0xf]
      %v310 = vld [vmem:[%s2 + $0xc] sm:$0xf]
      %v311 = vld [vmem:[%s236] sm:$0x3]
      %v316 = vunpack.c.l.b16 %v307
      %v317 = vunpack.c.l.b16 %v308
      %v318 = vunpack.c.l.b16 %v309
      %v319 = vunpack.c.l.b16 %v310
      %v320 = vpack.c.b16 %v317, %v316
      %v321 = vpack.c.b16 %v319, %v318
      %vm322 = vcmask 31744
      %v324 = vsel %vm322, %v320, 0
      %v327 = vsel %vm322, %v321, 0
      %vm329 = vcmask 1041408
      %v331 = vsel %vm329, %v311, 0
      %333 = vmatprep.subr.bf16.mxu0 0
      %334 = vmatpush1.bf16.msra.mxu0 %v331
      %335 = vmatprep.subr.bf16.mxu0 0
      %336 = vmatpush1.bf16.msra.mxu0 0
      %337 = vmatprep.subr.bf16.mxu0 0
      %338 = vmatpush1.bf16.msra.mxu0 0
      %339 = vmatprep.subr.bf16.mxu0 0
      %340 = vmatpush1.bf16.msra.mxu0 0
      %341 = vmatprep.subr.bf16.mxu0 0
      %342 = vmatpush1.bf16.msra.mxu0 0
      %343 = vmatprep.subr.bf16.mxu0 0
      %344 = vmatpush1.bf16.msra.mxu0 0
      %345 = vmatprep.subr.bf16.mxu0 0
      %346 = vmatpush1.bf16.msra.mxu0 0
      %347 = vmatprep.subr.bf16.mxu0 0
      %348 = vmatpush1.bf16.msra.mxu0 0
      %349 = vmatprep.subr.bf16.mxu0 0
      %350 = vmatpush1.bf16.msra.mxu0 0
      %351 = vmatprep.subr.bf16.mxu0 0
      %352 = vmatpush1.bf16.msra.mxu0 0
      %353 = vmatprep.subr.bf16.mxu0 0
      %354 = vmatpush1.bf16.msra.mxu0 0
      %355 = vmatprep.subr.bf16.mxu0 0
      %356 = vmatpush1.bf16.msra.mxu0 0
      %357 = vmatprep.subr.bf16.mxu0 0
      %358 = vmatpush1.bf16.msra.mxu0 0
      %359 = vmatprep.subr.bf16.mxu0 0
      %360 = vmatpush1.bf16.msra.mxu0 0
      %361 = vmatprep.subr.bf16.mxu0 0
      %362 = vmatpush1.bf16.msra.mxu0 0
      %363 = vmatprep.subr.bf16.mxu0 0
      %364 = vmatpush1.bf16.msra.mxu0 0
      %365 = vmatprep.mubr.bf16.mxu0 0
      %366 = vmatmul.mubr.bf16.gmra.mrb[0].mxu0 %v324
      %v367 = vpop.f32.mrb[0].mxu0
      %v368 = vadd.f32 0.0, %v367
      %v369 = vpop.f32.mrb[0].mxu0
      %v370 = vpop.f32.mrb[0].mxu0
      %v371 = vadd.f32 0.0, %v370
      %v372 = vpop.f32.mrb[0].mxu0
      %373 = vmatprep.mubr.bf16.mxu0 0
      %374 = vmatmul.mubr.bf16.gmra.mrb[0].mxu0 %v327
      %v375 = vpop.f32.mrb[0].mxu0
      %v376 = vadd.f32 0.0, %v375
      %v377 = vpop.f32.mrb[0].mxu0
      %v378 = vpop.f32.mrb[0].mxu0
      %v379 = vadd.f32 0.0, %v378
      %v380 = vpop.f32.mrb[0].mxu0
      %381 = vdwg.mxu0
      %v382 = vadd.f32 %v303, %v368
      %v383 = vadd.f32 %v304, %v371
      %v384 = vadd.f32 %v305, %v376
      %v385 = vadd.f32 %v306, %v379
      %v386 = vxor.u32 %v382, 2147483648
      %v387 = vxor.u32 %v383, 2147483648
      %v388 = vxor.u32 %v384, 2147483648
      %v389 = vxor.u32 %v385, 2147483648
      %v390 = vmul.f32 %v386, 1.442695
      %v391 = vpow.pop %v390
      %v392 = vmul.f32 %v387, 1.442695
      %v393 = vpow.pop %v392
      %v394 = vmul.f32 %v388, 1.442695
      %v395 = vpow.pop %v394
      %v396 = vmul.f32 %v389, 1.442695
      %v397 = vpow.pop %v396
      %v398 = vadd.f32 %v391, 1.0
      %v399 = vadd.f32 %v393, 1.0
      %v400 = vadd.f32 %v395, 1.0
      %v401 = vadd.f32 %v397, 1.0
      %v402 = vrcp.pop %v398
      %v403 = vmul.f32 1.0, %v402
      %v404 = vrcp.pop %v399
      %v405 = vmul.f32 1.0, %v404
      %v406 = vrcp.pop %v400
      %v407 = vmul.f32 1.0, %v406
      %v408 = vrcp.pop %v401
      %v409 = vmul.f32 1.0, %v408
      %v410 = vmul.f32 %v382, %v403
      %v411 = vmul.f32 %v383, %v405
      %v412 = vmul.f32 %v384, %v407
      %v413 = vmul.f32 %v385, %v409
      %vm414 = vcmask 146432
      %415 = vst.msk [vmem:[%s241] sm:$0xff] %vm414, %v410
      %416 = vst.msk [vmem:[%s241 + $0x8] sm:$0xff] %vm414, %v411
      %417 = vst.msk [vmem:[%s241 + $0x10] sm:$0xff] %vm414, %v412
      %418 = vst.msk [vmem:[%s241 + $0x18] sm:$0xff] %vm414, %v413
      %p419 = scmp.lt.s32.totalorder %s16, 1
      %s420 = scalar_select %p419, %s16, 1
      %s421 = smul.addr %s420, 4
      %s422 = smul.addr %s421, 8
      %s423 = scalar_lea.vmem %s5, %s422
      // Predicated region
      $region41: #{my_residual_conv3d_forward.5} parent=39 // pred_check
        %p424 = pneg %p149
      $region42: #{my_residual_conv3d_forward.5} parent=39 // pred_check_branch
        %426 = sbr.rel (%p424) target = $region44
      $region43: #{my_residual_conv3d_forward.5} parent=39 // pred_region
        _
      $region44: #{my_residual_conv3d_forward.5} parent=39 // pred_fallthru
        _
    $region40: #{my_residual_conv3d_forward.5} parent=5 // pred_fallthru
      _
    %p427 = scmp.le.s32.totalorder 2, %s11
    // Predicated region
    $region45: #{my_residual_conv3d_forward.5} parent=5 // pred_check
      %p428 = pneg %p427
    $region46: #{my_residual_conv3d_forward.5} parent=5 // pred_check_branch
      %430 = sbr.rel (%p428) target = $region48
    $region47: #{my_residual_conv3d_forward.5} parent=5 // pred_region
      %s431 = ssub.s32 %s11, 2
      // Predicated region
      $region49: #{my_residual_conv3d_forward.5} parent=47 // pred_check
        %p432 = pneg %p155
      $region50: #{my_residual_conv3d_forward.5} parent=47 // pred_check_branch
        %434 = sbr.rel (%p432) target = $region52
      $region51: #{my_residual_conv3d_forward.5} parent=47 // pred_region
        %p435 = scmp.lt.s32.totalorder %s17, 1
        %s436 = scalar_select %p435, %s17, 1
        %s437 = smul.addr %s436, 4
        %s438 = smul.addr %s437, 8
        %s439 = scalar_lea.vmem %s5, %s438
      $region52: #{my_residual_conv3d_forward.5} parent=47 // pred_fallthru
        _
    $region48: #{my_residual_conv3d_forward.5} parent=5 // pred_fallthru
      _
  $region6: #{my_residual_conv3d_forward.5} parent=0 // loop_footer
    %s15 = sadd.s32 1, %s11
  $region7: #{my_residual_conv3d_forward.5} parent=0 // loop_footer_branch
    %10 = sbr.rel target = $region3
  $region8: #{my_residual_conv3d_forward.5} parent=0 // loop_exit
    _

</llo_original>
